<compile_context>
chip_gen: v7x
topology: tpu7x:2x2x1
jax: 0.10.0
libtpu: 0.0.40
codegen_flags: <defaults>
</compile_context>

<pallas_src>
import jax
import jax.numpy as jnp
import numpy as np
from jax.experimental import pallas as pl
from jax.experimental.pallas import tpu as pltpu

BN_EPS = 1e-5
LANES = 128


# --------------------------------------------------------------------------------------
# kernels
# --------------------------------------------------------------------------------------
def conv_stats_kernel(p_ref, w_ref, stats_ref):
    """Pass 1: one row-tile of the im2col conv -> partial BN stats only (no y to HBM).

    p_ref:     (TR, KC)  im2col patches tile (KC = KH*KW*Cin)
    w_ref:     (KC, CP)  weight slab, Cout zero-padded to CP lanes (resident, single-buffered)
    stats_ref: (2,  CP)  row 0 = sum(y), row 1 = sum(y*y) over this tile
    """
    y = jnp.dot(p_ref[...], w_ref[...], preferred_element_type=jnp.float32)
    stats_ref[0:1, :] = jnp.sum(y, axis=0, keepdims=True)
    stats_ref[1:2, :] = jnp.sum(y * y, axis=0, keepdims=True)


def conv_bn_apply_kernel(p_ref, w_ref, scale_ref, shift_ref, o_ref):
    """Pass 2: recompute the matmul for one row-tile, apply folded BN, write Cout lanes.

    p_ref: (TR, KC), w_ref: (KC, CP), scale/shift: (1, Cout), o_ref: (TR, Cout).
    """
    y = jnp.dot(p_ref[...], w_ref[...], preferred_element_type=jnp.float32)
    co = o_ref.shape[-1]
    o_ref[...] = y[:, :co] * scale_ref[...] + shift_ref[...]


# --------------------------------------------------------------------------------------
# tiling / VMEM sizing helpers
# --------------------------------------------------------------------------------------
def _round_up(a, b):
    return (a + b - 1) // b * b


def _vmem_budget_bytes():
    """~75% of physical VMEM per generation (v5e/v6e: 128 MiB -> 96 MiB, v7x: 64 -> 48)."""
    try:
        cap = int(pltpu.get_tpu_info().vmem_capacity_bytes)
    except Exception:
        cap = 64 << 20  # conservative fallback (v7x physical)
    return (cap * 3) // 4


def _phase_vmem_need(tr, kc, cp, cout, in_bytes):
    """Per-pass VMEM needs (the two pallas_calls never coexist, so take the max)."""
    w_bytes = kc * cp * in_bytes                 # weight slab, single-buffered (pl.Buffered(1))
    patches = 2 * tr * kc * in_bytes             # double-buffered patch tile
    p1 = patches + w_bytes + 2 * 2 * cp * 4                          # + per-tile stats
    p2 = patches + w_bytes + 2 * tr * cout * 4 + 2 * 2 * cout * 4    # + out tile + scale/shift
    return max(p1, p2)


def _pick_tile_rows(rows, kc, cp, cout, in_bytes, budget, target):
    """Largest row tile that fits the per-generation VMEM budget (ROWS is padded to it)."""
    cands = [c for c in (2048, 1024, 512, 256, 128, 64, 32, 16, 8) if c <= target]
    for cand in cands:
        if cand > max(rows, 8):
            continue  # don't pad far beyond the real row count
        if _phase_vmem_need(cand, kc, cp, cout, in_bytes) <= budget:
            return cand
    return 8


# --------------------------------------------------------------------------------------
# forward wrapper
# --------------------------------------------------------------------------------------
def my_conv2d_bn_shortcut_forward(x_nchw, weight_oihw, mask_oihw, gamma, beta,
                                  *, padding=1, compute_dtype=jnp.bfloat16,
                                  target_tile_rows=1024):
    """Matches MyConv2dBNShortcut.forward (NCHW in, NCHW out).

    compute_dtype: MXU input dtype. bf16 is the recommended default on all of
    v5e/v6e/v7x (both passes are HBM-bound; bf16 halves patch+weight DMA bytes and is
    full-rate on every MXU generation). Accumulation and BN statistics stay f32.
    Pass jnp.float32 for bit-accurate parity with the f32 PyTorch reference.
    """
    # mask.apply(conv): elementwise weight masking (glue)
    w_masked = (weight_oihw * mask_oihw).astype(jnp.float32)
    Cout, Cin, KH, KW = w_masked.shape
    N, _, H, W = x_nchw.shape
    H_out = H + 2 * padding - KH + 1
    W_out = W + 2 * padding - KW + 1
    ROWS = N * H_out * W_out
    KC = KH * KW * Cin
    CP = _round_up(Cout, LANES)

    in_bytes = jnp.dtype(compute_dtype).itemsize
    vmem_budget = _vmem_budget_bytes()
    TR = _pick_tile_rows(ROWS, KC, CP, Cout, in_bytes, vmem_budget, target_tile_rows)
    # TODO(synk): if _phase_vmem_need still exceeds the v7x 48 MiB budget at huge Cin,
    # add a K grid axis with a VMEM f32 accumulator (pl.when init/finalize) instead of
    # shrinking TR toward 8.

    ROWS_pad = _round_up(ROWS, TR)
    num_tiles = ROWS_pad // TR
    if num_tiles > 1 and num_tiles % 2 == 1:
        num_tiles += 1                      # even tile count -> clean 2-TC split on v7x
        ROWS_pad = num_tiles * TR

    # --- layout plumbing (wrapper, XLA): NCHW->NHWC, pad, im2col ---------------------
    # TODO(synk): at large Cin the KH*KW x patch blow-up in HBM (read twice, once per
    # pass) should be replaced by a haloed input BlockSpec + in-VMEM im2col (or KH*KW
    # shifted matmuls via pltpu.roll over one resident input tile); alternatively fall
    # back to a stored bf16 y intermediate when KC*itemsize >> Cout*4.
    x_nhwc = jnp.transpose(x_nchw, (0, 2, 3, 1)).astype(jnp.float32)
    x_pad = jnp.pad(x_nhwc, ((0, 0), (padding, padding), (padding, padding), (0, 0)))
    cols = [x_pad[:, kh:kh + H_out, kw:kw + W_out, :]
            for kh in range(KH) for kw in range(KW)]
    patches = jnp.concatenate(cols, axis=-1).reshape(ROWS, KC)
    patches = jnp.pad(patches, ((0, ROWS_pad - ROWS), (0, 0)))   # zero rows: stats-neutral
    patches = patches.astype(compute_dtype)

    # weight slab (KC, Cout) in matching patch order, zero-padded to CP lanes
    w_slab = jnp.transpose(w_masked, (2, 3, 1, 0)).reshape(KC, Cout)
    w_slab = jnp.pad(w_slab, ((0, 0), (0, CP - Cout))).astype(compute_dtype)

    vmem_limit = int(min(vmem_budget, 128 << 20))
    # constant block index -> never re-fetched; single buffer frees KC*CP*itemsize of VMEM
    weight_spec = pl.BlockSpec((KC, CP), lambda i: (0, 0), pipeline_mode=pl.Buffered(1))

    # --- pass 1: conv matmul -> per-tile partial BN stats only (no y to HBM) ---------
    p1_cost = pl.CostEstimate(
        flops=2 * ROWS_pad * KC * CP,
        transcendentals=0,
        bytes_accessed=ROWS_pad * KC * in_bytes + KC * CP * in_bytes + num_tiles * 2 * CP * 4)
    partial_stats = pl.pallas_call(
        conv_stats_kernel,
        out_shape=jax.ShapeDtypeStruct((num_tiles, 2, CP), jnp.float32),
        grid_spec=pltpu.PrefetchScalarGridSpec(
            num_scalar_prefetch=0,
            grid=(num_tiles,),
            in_specs=[
                pl.BlockSpec((TR, KC), lambda i: (i, 0)),
                weight_spec,
            ],
            out_specs=pl.BlockSpec((None, 2, CP), lambda i: (i, 0, 0)),
        ),
        compiler_params=pltpu.CompilerParams(
            dimension_semantics=("parallel",),   # per-tile stats keep the row axis parallel
            vmem_limit_bytes=vmem_limit,
        ),
        cost_estimate=p1_cost,
    )(patches, w_slab)

    # --- finalize batch stats + fold BN affine (tiny (num_tiles,2,CP) glue) ----------
    # NOTE: one-pass variance (E[y^2]-E[y]^2) in f32 is cancellation-prone when
    # |mean| >> std; the clamp keeps it non-negative. Switch to a per-tile (mean, M2)
    # Welford merge if activations can carry very large means.
    count = jnp.float32(ROWS)                              # true rows; padded rows added 0
    sums = jnp.sum(partial_stats, axis=0)                  # (2, CP)
    mean = sums[0, :Cout] / count
    var = jnp.maximum(sums[1, :Cout] / count - mean * mean, 0.0)
    inv_std = jax.lax.rsqrt(var + BN_EPS)
    g = gamma.astype(jnp.float32)
    b = beta.astype(jnp.float32)
    scale = (g * inv_std).reshape(1, Cout)
    shift = (b - mean * g * inv_std).reshape(1, Cout)

    # --- pass 2: recompute matmul, apply scale/shift, write unpadded Cout lanes ------
    p2_cost = pl.CostEstimate(
        flops=2 * ROWS_pad * KC * CP + 2 * ROWS_pad * Cout,
        transcendentals=0,
        bytes_accessed=ROWS_pad * KC * in_bytes + KC * CP * in_bytes + ROWS_pad * Cout * 4)
    out_flat = pl.pallas_call(
        conv_bn_apply_kernel,
        out_shape=jax.ShapeDtypeStruct((ROWS_pad, Cout), jnp.float32),
        grid_spec=pltpu.PrefetchScalarGridSpec(
            num_scalar_prefetch=0,
            grid=(num_tiles,),
            in_specs=[
                pl.BlockSpec((TR, KC), lambda i: (i, 0)),
                weight_spec,
                pl.BlockSpec((1, Cout), lambda i: (0, 0)),
                pl.BlockSpec((1, Cout), lambda i: (0, 0)),
            ],
            out_specs=pl.BlockSpec((TR, Cout), lambda i: (i, 0)),
        ),
        compiler_params=pltpu.CompilerParams(
            dimension_semantics=("parallel",),
            vmem_limit_bytes=vmem_limit,
        ),
        cost_estimate=p2_cost,
    )(patches, w_slab, scale, shift)

    # drop padded rows (no-op when ROWS_pad == ROWS), back to NCHW (glue)
    out_nhwc = out_flat[:ROWS].reshape(N, H_out, W_out, Cout)
    return jnp.transpose(out_nhwc, (0, 3, 1, 2))


# --------------------------------------------------------------------------------------
# plain-JAX reference and self-test
# --------------------------------------------------------------------------------------
def reference_forward(x_nchw, weight_oihw, mask_oihw, gamma, beta, *, padding=1):
    """Plain-JAX reference (masked conv + train-mode BN) for correctness checking."""
    w = weight_oihw * mask_oihw
    y = jax.lax.conv_general_dilated(
        x_nchw, w, window_strides=(1, 1),
        padding=((padding, padding), (padding, padding)),
        dimension_numbers=("NCHW", "OIHW", "NCHW"),
        preferred_element_type=jnp.float32)
    mean = jnp.mean(y, axis=(0, 2, 3), keepdims=True)
    var = jnp.mean((y - mean) ** 2, axis=(0, 2, 3), keepdims=True)
    return (y - mean) * jax.lax.rsqrt(var + BN_EPS) * gamma[None, :, None, None] \
        + beta[None, :, None, None]


if __name__ == "__main__":
    # MyConv2dBNShortcut(in_channels=4, out_channels=8, kernel_size=3, padding=1, bias=False)
    N, Cin, H, W = 2, 4, 16, 16
    Cout, K, padding = 8, 3, 1

    key = jax.random.PRNGKey(0)
    kx, kw = jax.random.split(key)

    x = jax.random.normal(kx, (N, Cin, H, W), dtype=jnp.float32)                 # NCHW input
    weight = jax.random.normal(kw, (Cout, Cin, K, K), dtype=jnp.float32) * 0.1   # OIHW conv weight
    mask = jnp.ones((Cout, Cin, K, K), dtype=jnp.float32)                        # UnstructuredMask init = ones
    gamma = jnp.ones((Cout,), dtype=jnp.float32)                                 # BN weight init
    beta = jnp.zeros((Cout,), dtype=jnp.float32)                                 # BN bias init

    ref = jax.block_until_ready(
        reference_forward(x, weight, mask, gamma, beta, padding=padding))

    # f32 MXU inputs: bit-accurate parity check with the f32 PyTorch semantics.
    fwd_f32 = jax.jit(lambda *a: my_conv2d_bn_shortcut_forward(
        *a, padding=padding, compute_dtype=jnp.float32))
    out = jax.block_until_ready(fwd_f32(x, weight, mask, gamma, beta))
    assert out.shape == (N, Cout, H, W), out.shape
    np.testing.assert_allclose(np.asarray(out), np.asarray(ref), rtol=2e-3, atol=2e-3)

    # bf16 MXU inputs (the recommended default on v5e/v6e/v7x): looser tolerance.
    fwd_bf16 = jax.jit(lambda *a: my_conv2d_bn_shortcut_forward(*a, padding=padding))
    out_bf16 = jax.block_until_ready(fwd_bf16(x, weight, mask, gamma, beta))
    np.testing.assert_allclose(np.asarray(out_bf16), np.asarray(ref), rtol=5e-2, atol=5e-2)

    print("KERNEL_OK")
</pallas_src>

<mosaic_0001>
module attributes {stable_mosaic.version = 11 : i64} {
  func.func @conv_stats_kernel(%arg0: i32, %arg1: memref<512x36xf32, #tpu.memory_space<vmem>>, %arg2: memref<36x128xf32, #tpu.memory_space<vmem>>, %arg3: memref<1x2x128xf32, #tpu.memory_space<vmem>>) attributes {dimension_semantics = [#tpu.dimension_semantics<parallel>], iteration_bounds = array<i64: 1>, scalar_prefetch = 0 : i64, scratch_operands = 0 : i64, tpu.core_type = #tpu.core_type<tc>, window_params = [{transform_indices = @transform_0, window_bounds = array<i64: 512, 36>}, {pipeline_mode = #tpu.pipeline_mode<synchronous>, transform_indices = @transform_1, window_bounds = array<i64: 36, 128>}, {transform_indices = @transform_2, window_bounds = array<i64: 1, 2, 128>}]} {
    %c0 = arith.constant 0 : index
    %c0_0 = arith.constant 0 : index
    %0 = vector.load %arg1[%c0, %c0_0] : memref<512x36xf32, #tpu.memory_space<vmem>>, vector<512x36xf32>
    %c0_1 = arith.constant 0 : index
    %c0_2 = arith.constant 0 : index
    %1 = vector.load %arg2[%c0_1, %c0_2] : memref<36x128xf32, #tpu.memory_space<vmem>>, vector<36x128xf32>
    %cst = arith.constant dense<0.000000e+00> : vector<512x128xf32>
    %2 = tpu.matmul %0, %1, %cst {dimension_numbers = #tpu.dot_dimension_numbers<[1], [0], [0], [1], [0, 0, 1, 1], [], []>} : vector<512x36xf32>, vector<36x128xf32>, vector<512x128xf32> -> vector<512x128xf32>
    %cst_3 = arith.constant dense<0.000000e+00> : vector<128xf32>
    %3 = vector.multi_reduction <add>, %2, %cst_3 [0] : vector<512x128xf32> to vector<128xf32>
    %4 = vector.shape_cast %3 : vector<128xf32> to vector<1x128xf32>
    %c0_4 = arith.constant 0 : index
    %c0_5 = arith.constant 0 : index
    %c0_6 = arith.constant 0 : index
    %5 = vector.load %arg3[%c0_4, %c0_5, %c0_6] : memref<1x2x128xf32, #tpu.memory_space<vmem>>, vector<1x1x128xf32>
    %6 = vector.shape_cast %5 : vector<1x1x128xf32> to vector<1x128xf32>
    %7 = vector.shape_cast %4 : vector<1x128xf32> to vector<1x1x128xf32>
    tpu.vector_store %arg3[%c0_4, %c0_5, %c0_6], %7 {strides = array<i32>} : memref<1x2x128xf32, #tpu.memory_space<vmem>>, vector<1x1x128xf32>,
    %8 = arith.mulf %2, %2 : vector<512x128xf32>
    %cst_7 = arith.constant dense<0.000000e+00> : vector<128xf32>
    %9 = vector.multi_reduction <add>, %8, %cst_7 [0] : vector<512x128xf32> to vector<128xf32>
    %10 = vector.shape_cast %9 : vector<128xf32> to vector<1x128xf32>
    %c0_8 = arith.constant 0 : index
    %c1 = arith.constant 1 : index
    %c0_9 = arith.constant 0 : index
    %11 = vector.load %arg3[%c0_8, %c1, %c0_9] : memref<1x2x128xf32, #tpu.memory_space<vmem>>, vector<1x1x128xf32>
    %12 = vector.shape_cast %11 : vector<1x1x128xf32> to vector<1x128xf32>
    %13 = vector.shape_cast %10 : vector<1x128xf32> to vector<1x1x128xf32>
    tpu.vector_store %arg3[%c0_8, %c1, %c0_9], %13 {strides = array<i32>} : memref<1x2x128xf32, #tpu.memory_space<vmem>>, vector<1x1x128xf32>,
    return
  }
  func.func @transform_0(%arg0: i32) -> (i32, i32) {
    %c0_i32 = arith.constant 0 : i32
    %c0_i32_0 = arith.constant 0 : i32
    return %arg0, %c0_i32 : i32, i32
  }
  func.func @transform_1(%arg0: i32) -> (i32, i32) {
    %c0_i32 = arith.constant 0 : i32
    %c0_i32_0 = arith.constant 0 : i32
    %c0_i32_1 = arith.constant 0 : i32
    return %c0_i32, %c0_i32_0 : i32, i32
  }
  func.func @transform_2(%arg0: i32) -> (i32, i32, i32) {
    %c0_i32 = arith.constant 0 : i32
    %c0_i32_0 = arith.constant 0 : i32
    %c0_i32_1 = arith.constant 0 : i32
    return %arg0, %c0_i32, %c0_i32_0 : i32, i32, i32
  }
}

module attributes {stable_mosaic.version = 11 : i64} {
  func.func @conv_bn_apply_kernel(%arg0: i32, %arg1: memref<512x36xf32, #tpu.memory_space<vmem>>, %arg2: memref<36x128xf32, #tpu.memory_space<vmem>>, %arg3: memref<1x8xf32, #tpu.memory_space<vmem>>, %arg4: memref<1x8xf32, #tpu.memory_space<vmem>>, %arg5: memref<512x8xf32, #tpu.memory_space<vmem>>) attributes {dimension_semantics = [#tpu.dimension_semantics<parallel>], iteration_bounds = array<i64: 1>, scalar_prefetch = 0 : i64, scratch_operands = 0 : i64, tpu.core_type = #tpu.core_type<tc>, window_params = [{transform_indices = @transform_0, window_bounds = array<i64: 512, 36>}, {pipeline_mode = #tpu.pipeline_mode<synchronous>, transform_indices = @transform_1, window_bounds = array<i64: 36, 128>}, {pipeline_mode = #tpu.pipeline_mode<synchronous>, transform_indices = @transform_2, window_bounds = array<i64: 1, 8>}, {pipeline_mode = #tpu.pipeline_mode<synchronous>, transform_indices = @transform_3, window_bounds = array<i64: 1, 8>}, {transform_indices = @transform_4, window_bounds = array<i64: 512, 8>}]} {
    %c0 = arith.constant 0 : index
    %c0_0 = arith.constant 0 : index
    %0 = vector.load %arg1[%c0, %c0_0] : memref<512x36xf32, #tpu.memory_space<vmem>>, vector<512x36xf32>
    %c0_1 = arith.constant 0 : index
    %c0_2 = arith.constant 0 : index
    %1 = vector.load %arg2[%c0_1, %c0_2] : memref<36x128xf32, #tpu.memory_space<vmem>>, vector<36x128xf32>
    %cst = arith.constant dense<0.000000e+00> : vector<512x128xf32>
    %2 = tpu.matmul %0, %1, %cst {dimension_numbers = #tpu.dot_dimension_numbers<[1], [0], [0], [1], [0, 0, 1, 1], [], []>} : vector<512x36xf32>, vector<36x128xf32>, vector<512x128xf32> -> vector<512x128xf32>
    %3 = vector.extract_strided_slice %2 {offsets = [0, 0], sizes = [512, 8], strides = [1, 1]} : vector<512x128xf32> to vector<512x8xf32>
    %c0_3 = arith.constant 0 : index
    %c0_4 = arith.constant 0 : index
    %4 = vector.load %arg3[%c0_3, %c0_4] : memref<1x8xf32, #tpu.memory_space<vmem>>, vector<1x8xf32>
    %5 = vector.broadcast %4 : vector<1x8xf32> to vector<512x8xf32>
    %6 = arith.mulf %3, %5 : vector<512x8xf32>
    %c0_5 = arith.constant 0 : index
    %c0_6 = arith.constant 0 : index
    %7 = vector.load %arg4[%c0_5, %c0_6] : memref<1x8xf32, #tpu.memory_space<vmem>>, vector<1x8xf32>
    %8 = vector.broadcast %7 : vector<1x8xf32> to vector<512x8xf32>
    %9 = arith.addf %6, %8 : vector<512x8xf32>
    %c0_7 = arith.constant 0 : index
    %c0_8 = arith.constant 0 : index
    %10 = vector.load %arg5[%c0_7, %c0_8] : memref<512x8xf32, #tpu.memory_space<vmem>>, vector<512x8xf32>
    tpu.vector_store %arg5[%c0_7, %c0_8], %9 {strides = array<i32>} : memref<512x8xf32, #tpu.memory_space<vmem>>, vector<512x8xf32>,
    return
  }
  func.func @transform_0(%arg0: i32) -> (i32, i32) {
    %c0_i32 = arith.constant 0 : i32
    %c0_i32_0 = arith.constant 0 : i32
    return %arg0, %c0_i32 : i32, i32
  }
  func.func @transform_1(%arg0: i32) -> (i32, i32) {
    %c0_i32 = arith.constant 0 : i32
    %c0_i32_0 = arith.constant 0 : i32
    %c0_i32_1 = arith.constant 0 : i32
    return %c0_i32, %c0_i32_0 : i32, i32
  }
  func.func @transform_2(%arg0: i32) -> (i32, i32) {
    %c0_i32 = arith.constant 0 : i32
    %c0_i32_0 = arith.constant 0 : i32
    %c0_i32_1 = arith.constant 0 : i32
    return %c0_i32, %c0_i32_0 : i32, i32
  }
  func.func @transform_3(%arg0: i32) -> (i32, i32) {
    %c0_i32 = arith.constant 0 : i32
    %c0_i32_0 = arith.constant 0 : i32
    %c0_i32_1 = arith.constant 0 : i32
    return %c0_i32, %c0_i32_0 : i32, i32
  }
  func.func @transform_4(%arg0: i32) -> (i32, i32) {
    %c0_i32 = arith.constant 0 : i32
    %c0_i32_0 = arith.constant 0 : i32
    return %arg0, %c0_i32 : i32, i32
  }
}

</mosaic_0001>

<llo_original>
// kernel: _lambda_.2
$region0: #{_lambda_.2}
  #allocation0 [shape = 'u32[]', space=smem, size = 0x4, offset = 0x4, fixed_abs, tag = 'smem constant byte address 0x4 - core index']
  #allocation1 [shape = 'u32[144,128]{1,0:T(1,128)}', space=vmem, size = 0x12000, scoped, tag = 'internal scratch']
  %s0 = inlined_call_operand.vmem [shape: f32[512,36], index: 0, kind: input, shape index: {}]
  %s1 = inlined_call_operand.vmem [shape: f32[36,128], index: 1, kind: input, shape index: {}]
  %s2 = inlined_call_operand.vmem [shape: f32[1,2,128], index: 2, kind: output, shape index: {}]
  %s3 = sld [smem:[#allocation0]]
  $region18: #{_lambda_.2} parent=0
    _
  %s5 = ssub.s32 1, %s3
  %s6 = scalar_select 0, %s5, %s3
  // Predicated region
  $region2: #{_lambda_.2} parent=0 // pred_check
    _
  $region3: #{_lambda_.2} parent=0 // pred_check_branch
    %8 = sbr.rel (0) target = $region5
  $region4: #{_lambda_.2} parent=0 // pred_region
    _
  $region5: #{_lambda_.2} parent=0 // pred_fallthru
    _
  // Predicated region
  $region6: #{_lambda_.2} parent=0 // pred_check
    _
  $region7: #{_lambda_.2} parent=0 // pred_check_branch
    %10 = sbr.rel (0) target = $region9
  $region8: #{_lambda_.2} parent=0 // pred_region
    _
  $region9: #{_lambda_.2} parent=0 // pred_fallthru
    _
  %v11 = vld [vmem:[%s0] sm:$0xff]
  %v12 = vld [vmem:[%s0 + $0x8] sm:$0xff]
  %v13 = vld [vmem:[%s0 + $0x10] sm:$0xff]
  %v14 = vld [vmem:[%s0 + $0x18] sm:$0xff]
  %v15 = vld [vmem:[%s0 + $0x20] sm:$0xff]
  %v16 = vld [vmem:[%s0 + $0x28] sm:$0xff]
  %v17 = vld [vmem:[%s0 + $0x30] sm:$0xff]
  %v18 = vld [vmem:[%s0 + $0x38] sm:$0xff]
  %v19 = vld [vmem:[%s0 + $0x40] sm:$0xff]
  %v20 = vld [vmem:[%s0 + $0x48] sm:$0xff]
  %v21 = vld [vmem:[%s0 + $0x50] sm:$0xff]
  %v22 = vld [vmem:[%s0 + $0x58] sm:$0xff]
  %v23 = vld [vmem:[%s0 + $0x60] sm:$0xff]
  %v24 = vld [vmem:[%s0 + $0x68] sm:$0xff]
  %v25 = vld [vmem:[%s0 + $0x70] sm:$0xff]
  %v26 = vld [vmem:[%s0 + $0x78] sm:$0xff]
  %v27 = vld [vmem:[%s0 + $0x80] sm:$0xff]
  %v28 = vld [vmem:[%s0 + $0x88] sm:$0xff]
  %v29 = vld [vmem:[%s0 + $0x90] sm:$0xff]
  %v30 = vld [vmem:[%s0 + $0x98] sm:$0xff]
  %v31 = vld [vmem:[%s0 + $0xa0] sm:$0xff]
  %v32 = vld [vmem:[%s0 + $0xa8] sm:$0xff]
  %v33 = vld [vmem:[%s0 + $0xb0] sm:$0xff]
  %v34 = vld [vmem:[%s0 + $0xb8] sm:$0xff]
  %v35 = vld [vmem:[%s0 + $0xc0] sm:$0xff]
  %v36 = vld [vmem:[%s0 + $0xc8] sm:$0xff]
  %v37 = vld [vmem:[%s0 + $0xd0] sm:$0xff]
  %v38 = vld [vmem:[%s0 + $0xd8] sm:$0xff]
  %v39 = vld [vmem:[%s0 + $0xe0] sm:$0xff]
  %v40 = vld [vmem:[%s0 + $0xe8] sm:$0xff]
  %v41 = vld [vmem:[%s0 + $0xf0] sm:$0xff]
  %v42 = vld [vmem:[%s0 + $0xf8] sm:$0xff]
  %v43 = vld [vmem:[%s0 + $0x100] sm:$0xff]
  %v44 = vld [vmem:[%s0 + $0x108] sm:$0xff]
  %v45 = vld [vmem:[%s0 + $0x110] sm:$0xff]
  %v46 = vld [vmem:[%s0 + $0x118] sm:$0xff]
  %v47 = vld [vmem:[%s0 + $0x120] sm:$0xff]
  %v48 = vld [vmem:[%s0 + $0x128] sm:$0xff]
  %v49 = vld [vmem:[%s0 + $0x130] sm:$0xff]
  %v50 = vld [vmem:[%s0 + $0x138] sm:$0xff]
  %v51 = vld [vmem:[%s0 + $0x140] sm:$0xff]
  %v52 = vld [vmem:[%s0 + $0x148] sm:$0xff]
  %v53 = vld [vmem:[%s0 + $0x150] sm:$0xff]
  %v54 = vld [vmem:[%s0 + $0x158] sm:$0xff]
  %v55 = vld [vmem:[%s0 + $0x160] sm:$0xff]
  %v56 = vld [vmem:[%s0 + $0x168] sm:$0xff]
  %v57 = vld [vmem:[%s0 + $0x170] sm:$0xff]
  %v58 = vld [vmem:[%s0 + $0x178] sm:$0xff]
  %v59 = vld [vmem:[%s0 + $0x180] sm:$0xff]
  %v60 = vld [vmem:[%s0 + $0x188] sm:$0xff]
  %v61 = vld [vmem:[%s0 + $0x190] sm:$0xff]
  %v62 = vld [vmem:[%s0 + $0x198] sm:$0xff]
  %v63 = vld [vmem:[%s0 + $0x1a0] sm:$0xff]
  %v64 = vld [vmem:[%s0 + $0x1a8] sm:$0xff]
  %v65 = vld [vmem:[%s0 + $0x1b0] sm:$0xff]
  %v66 = vld [vmem:[%s0 + $0x1b8] sm:$0xff]
  %v67 = vld [vmem:[%s0 + $0x1c0] sm:$0xff]
  %v68 = vld [vmem:[%s0 + $0x1c8] sm:$0xff]
  %v69 = vld [vmem:[%s0 + $0x1d0] sm:$0xff]
  %v70 = vld [vmem:[%s0 + $0x1d8] sm:$0xff]
  %v71 = vld [vmem:[%s0 + $0x1e0] sm:$0xff]
  %v72 = vld [vmem:[%s0 + $0x1e8] sm:$0xff]
  %v73 = vld [vmem:[%s0 + $0x1f0] sm:$0xff]
  %v74 = vld [vmem:[%s0 + $0x1f8] sm:$0xff]
  %v75 = vld [vmem:[%s1] sm:$0xff]
  %v76 = vld [vmem:[%s1 + $0x8] sm:$0xff]
  %v77 = vld [vmem:[%s1 + $0x10] sm:$0xff]
  %v78 = vld [vmem:[%s1 + $0x18] sm:$0xff]
  %v79 = vld [vmem:[%s1 + $0x20] sm:$0xf]
  %vm80 = vcmask 293888
  %v82 = vsel %vm80, %v11, 0
  %v85 = vsel %vm80, %v12, 0
  %v88 = vsel %vm80, %v13, 0
  %v91 = vsel %vm80, %v14, 0
  %v94 = vsel %vm80, %v15, 0
  %v97 = vsel %vm80, %v16, 0
  %v100 = vsel %vm80, %v17, 0
  %v103 = vsel %vm80, %v18, 0
  %v106 = vsel %vm80, %v19, 0
  %v109 = vsel %vm80, %v20, 0
  %v112 = vsel %vm80, %v21, 0
  %v115 = vsel %vm80, %v22, 0
  %v118 = vsel %vm80, %v23, 0
  %v121 = vsel %vm80, %v24, 0
  %v124 = vsel %vm80, %v25, 0
  %v127 = vsel %vm80, %v26, 0
  %v130 = vsel %vm80, %v27, 0
  %v133 = vsel %vm80, %v28, 0
  %v136 = vsel %vm80, %v29, 0
  %v139 = vsel %vm80, %v30, 0
  %v142 = vsel %vm80, %v31, 0
  %v145 = vsel %vm80, %v32, 0
  %v148 = vsel %vm80, %v33, 0
  %v151 = vsel %vm80, %v34, 0
  %v154 = vsel %vm80, %v35, 0
  %v157 = vsel %vm80, %v36, 0
  %v160 = vsel %vm80, %v37, 0
  %v163 = vsel %vm80, %v38, 0
  %v166 = vsel %vm80, %v39, 0
  %v169 = vsel %vm80, %v40, 0
  %v172 = vsel %vm80, %v41, 0
  %v175 = vsel %vm80, %v42, 0
  %v178 = vsel %vm80, %v43, 0
  %v181 = vsel %vm80, %v44, 0
  %v184 = vsel %vm80, %v45, 0
  %v187 = vsel %vm80, %v46, 0
  %v190 = vsel %vm80, %v47, 0
  %v193 = vsel %vm80, %v48, 0
  %v196 = vsel %vm80, %v49, 0
  %v199 = vsel %vm80, %v50, 0
  %v202 = vsel %vm80, %v51, 0
  %v205 = vsel %vm80, %v52, 0
  %v208 = vsel %vm80, %v53, 0
  %v211 = vsel %vm80, %v54, 0
  %v214 = vsel %vm80, %v55, 0
  %v217 = vsel %vm80, %v56, 0
  %v220 = vsel %vm80, %v57, 0
  %v223 = vsel %vm80, %v58, 0
  %v226 = vsel %vm80, %v59, 0
  %v229 = vsel %vm80, %v60, 0
  %v232 = vsel %vm80, %v61, 0
  %v235 = vsel %vm80, %v62, 0
  %v238 = vsel %vm80, %v63, 0
  %v241 = vsel %vm80, %v64, 0
  %v244 = vsel %vm80, %v65, 0
  %v247 = vsel %vm80, %v66, 0
  %v250 = vsel %vm80, %v67, 0
  %v253 = vsel %vm80, %v68, 0
  %v256 = vsel %vm80, %v69, 0
  %v259 = vsel %vm80, %v70, 0
  %v262 = vsel %vm80, %v71, 0
  %v265 = vsel %vm80, %v72, 0
  %v268 = vsel %vm80, %v73, 0
  %v271 = vsel %vm80, %v74, 0
  %vm273 = vcmask 1043456
  %v275 = vsel %vm273, %v79, 0
  %277 = vmatprep.subr.mxu0 0.0
  %278 = vmatpush1.msra.mxu0 %v75
  %279 = vmatprep.subr.mxu0 0.0
  %280 = vmatpush1.msra.mxu0 %v76
  %281 = vmatprep.subr.mxu0 0.0
  %282 = vmatpush1.msra.mxu0 %v77
  %283 = vmatprep.subr.mxu0 0.0
  %284 = vmatpush1.msra.mxu0 %v78
  %285 = vmatprep.subr.mxu0 0.0
  %286 = vmatpush1.msra.mxu0 %v275
  %287 = vmatprep.subr.mxu0 0.0
  %288 = vmatpush1.msra.mxu0 0.0
  %289 = vmatprep.subr.mxu0 0.0
  %290 = vmatpush1.msra.mxu0 0.0
  %291 = vmatprep.subr.mxu0 0.0
  %292 = vmatpush1.msra.mxu0 0.0
  %293 = vmatprep.subr.mxu0 0.0
  %294 = vmatpush1.msra.mxu0 0.0
  %295 = vmatprep.subr.mxu0 0.0
  %296 = vmatpush1.msra.mxu0 0.0
  %297 = vmatprep.subr.mxu0 0.0
  %298 = vmatpush1.msra.mxu0 0.0
  %299 = vmatprep.subr.mxu0 0.0
  %300 = vmatpush1.msra.mxu0 0.0
  %301 = vmatprep.subr.mxu0 0.0
  %302 = vmatpush1.msra.mxu0 0.0
  %303 = vmatprep.subr.mxu0 0.0
  %304 = vmatpush1.msra.mxu0 0.0
  %305 = vmatprep.subr.mxu0 0.0
  %306 = vmatpush1.msra.mxu0 0.0
  %307 = vmatprep.subr.mxu0 0.0
  %308 = vmatpush1.msra.mxu0 0.0
  %309 = vmatprep.subr.mxu0 0.0
  %310 = vmatpush1.msra.mxu0 0.0
  %311 = vmatprep.subr.mxu0 0.0
  %312 = vmatpush1.msra.mxu0 0.0
  %313 = vmatprep.subr.mxu0 0.0
  %314 = vmatpush1.msra.mxu0 0.0
  %315 = vmatprep.subr.mxu0 0.0
  %316 = vmatpush1.msra.mxu0 0.0
  %317 = vmatprep.subr.mxu0 0.0
  %318 = vmatpush1.msra.mxu0 0.0
  %319 = vmatprep.subr.mxu0 0.0
  %320 = vmatpush1.msra.mxu0 0.0
  %321 = vmatprep.subr.mxu0 0.0
  %322 = vmatpush1.msra.mxu0 0.0
  %323 = vmatprep.subr.mxu0 0.0
  %324 = vmatpush1.msra.mxu0 0.0
  %325 = vmatprep.subr.mxu0 0.0
  %326 = vmatpush1.msra.mxu0 0.0
  %327 = vmatprep.subr.mxu0 0.0
  %328 = vmatpush1.msra.mxu0 0.0
  %329 = vmatprep.subr.mxu0 0.0
  %330 = vmatpush1.msra.mxu0 0.0
  %331 = vmatprep.subr.mxu0 0.0
  %332 = vmatpush1.msra.mxu0 0.0
  %333 = vmatprep.subr.mxu0 0.0
  %334 = vmatpush1.msra.mxu0 0.0
  %335 = vmatprep.subr.mxu0 0.0
  %336 = vmatpush1.msra.mxu0 0.0
  %337 = vmatprep.subr.mxu0 0.0
  %338 = vmatpush1.msra.mxu0 0.0
  %339 = vmatprep.subr.mxu0 0.0
  %340 = vmatpush1.msra.mxu0 0.0
  %341 = vmatprep.mubr.f32.mxu0 0.0
  %342 = vmatmul.mubr.f32.gmra.mrb[0].mxu0 %v82
  %v343 = vpop.f32.mrb[0].mxu0
  %v344 = vadd.f32 0.0, %v343
  %v345 = vpop.f32.mrb[0].mxu0
  %346 = vmatprep.mubr.f32.mxu0 0.0
  %347 = vmatmul.mubr.f32.gmra.mrb[0].mxu0 %v85
  %v348 = vpop.f32.mrb[0].mxu0
  %v349 = vadd.f32 0.0, %v348
  %v350 = vpop.f32.mrb[0].mxu0
  %351 = vmatprep.mubr.f32.mxu0 0.0
  %352 = vmatmul.mubr.f32.gmra.mrb[0].mxu0 %v88
  %v353 = vpop.f32.mrb[0].mxu0
  %v354 = vadd.f32 0.0, %v353
  %v355 = vpop.f32.mrb[0].mxu0
  %356 = vmatprep.mubr.f32.mxu0 0.0
  %357 = vmatmul.mubr.f32.gmra.mrb[0].mxu0 %v91
  %v358 = vpop.f32.mrb[0].mxu0
  %v359 = vadd.f32 0.0, %v358
  %v360 = vpop.f32.mrb[0].mxu0
  %361 = vmatprep.mubr.f32.mxu0 0.0
  %362 = vmatmul.mubr.f32.gmra.mrb[0].mxu0 %v94
  %v363 = vpop.f32.mrb[0].mxu0
  %v364 = vadd.f32 0.0, %v363
  %v365 = vpop.f32.mrb[0].mxu0
  %366 = vmatprep.mubr.f32.mxu0 0.0
  %367 = vmatmul.mubr.f32.gmra.mrb[0].mxu0 %v97
  %v368 = vpop.f32.mrb[0].mxu0
  %v369 = vadd.f32 0.0, %v368
  %v370 = vpop.f32.mrb[0].mxu0
  %371 = vmatprep.mubr.f32.mxu0 0.0
  %372 = vmatmul.mubr.f32.gmra.mrb[0].mxu0 %v100
  %v373 = vpop.f32.mrb[0].mxu0
  %v374 = vadd.f32 0.0, %v373
  %v375 = vpop.f32.mrb[0].mxu0
  %376 = vmatprep.mubr.f32.mxu0 0.0
  %377 = vmatmul.mubr.f32.gmra.mrb[0].mxu0 %v103
  %v378 = vpop.f32.mrb[0].mxu0
  %v379 = vadd.f32 0.0, %v378
  %v380 = vpop.f32.mrb[0].mxu0
  %381 = vmatprep.mubr.f32.mxu0 0.0
  %382 = vmatmul.mubr.f32.gmra.mrb[0].mxu0 %v106
  %v383 = vpop.f32.mrb[0].mxu0
  %v384 = vadd.f32 0.0, %v383
  %v385 = vpop.f32.mrb[0].mxu0
  %386 = vmatprep.mubr.f32.mxu0 0.0
  %387 = vmatmul.mubr.f32.gmra.mrb[0].mxu0 %v109
  %v388 = vpop.f32.mrb[0].mxu0
  %v389 = vadd.f32 0.0, %v388
  %v390 = vpop.f32.mrb[0].mxu0
  %391 = vmatprep.mubr.f32.mxu0 0.0
  %392 = vmatmul.mubr.f32.gmra.mrb[0].mxu0 %v112
  %v393 = vpop.f32.mrb[0].mxu0
  %v394 = vadd.f32 0.0, %v393
  %v395 = vpop.f32.mrb[0].mxu0
  %396 = vmatprep.mubr.f32.mxu0 0.0
  %397 = vmatmul.mubr.f32.gmra.mrb[0].mxu0 %v115
  %v398 = vpop.f32.mrb[0].mxu0
  %v399 = vadd.f32 0.0, %v398
  %v400 = vpop.f32.mrb[0].mxu0
  %401 = vmatprep.mubr.f32.mxu0 0.0
  %402 = vmatmul.mubr.f32.gmra.mrb[0].mxu0 %v118
  %v403 = vpop.f32.mrb[0].mxu0
  %v404 = vadd.f32 0.0, %v403
  %v405 = vpop.f32.mrb[0].mxu0
  %406 = vmatprep.mubr.f32.mxu0 0.0
  %407 = vmatmul.mubr.f32.gmra.mrb[0].mxu0 %v121
  %v408 = vpop.f32.mrb[0].mxu0
  %v409 = vadd.f32 0.0, %v408
  %v410 = vpop.f32.mrb[0].mxu0
  %411 = vmatprep.mubr.f32.mxu0 0.0
  %412 = vmatmul.mubr.f32.gmra.mrb[0].mxu0 %v124
  %v413 = vpop.f32.mrb[0].mxu0
  %v414 = vadd.f32 0.0, %v413
  %v415 = vpop.f32.mrb[0].mxu0
  %416 = vmatprep.mubr.f32.mxu0 0.0
  %417 = vmatmul.mubr.f32.gmra.mrb[0].mxu0 %v127
  %v418 = vpop.f32.mrb[0].mxu0
  %v419 = vadd.f32 0.0, %v418
  %v420 = vpop.f32.mrb[0].mxu0
  %421 = vmatprep.mubr.f32.mxu0 0.0
  %422 = vmatmul.mubr.f32.gmra.mrb[0].mxu0 %v130
  %v423 = vpop.f32.mrb[0].mxu0
  %v424 = vadd.f32 0.0, %v423
  %v425 = vpop.f32.mrb[0].mxu0
  %426 = vmatprep.mubr.f32.mxu0 0.0
  %427 = vmatmul.mubr.f32.gmra.mrb[0].mxu0 %v133
  %v428 = vpop.f32.mrb[0].mxu0
  %v429 = vadd.f32 0.0, %v428
  %v430 = vpop.f32.mrb[0].mxu0
  %431 = vmatprep.mubr.f32.mxu0 0.0
  %432 = vmatmul.mubr.f32.gmra.mrb[0].mxu0 %v136
  %v433 = vpop.f32.mrb[0].mxu0
  %v434 = vadd.f32 0.0, %v433
  %v435 = vpop.f32.mrb[0].mxu0
  %436 = vmatprep.mubr.f32.mxu0 0.0
  %437 = vmatmul.mubr.f32.gmra.mrb[0].mxu0 %v139
  %v438 = vpop.f32.mrb[0].mxu0
  %v439 = vadd.f32 0.0, %v438
  %v440 = vpop.f32.mrb[0].mxu0
  %441 = vmatprep.mubr.f32.mxu0 0.0
  %442 = vmatmul.mubr.f32.gmra.mrb[0].mxu0 %v142
  %v443 = vpop.f32.mrb[0].mxu0
  %v444 = vadd.f32 0.0, %v443
  %v445 = vpop.f32.mrb[0].mxu0
  %446 = vmatprep.mubr.f32.mxu0 0.0
  %447 = vmatmul.mubr.f32.gmra.mrb[0].mxu0 %v145
  %v448 = vpop.f32.mrb[0].mxu0
  %v449 = vadd.f32 0.0, %v448
  %v450 = vpop.f32.mrb[0].mxu0
  %451 = vmatprep.mubr.f32.mxu0 0.0
  %452 = vmatmul.mubr.f32.gmra.mrb[0].mxu0 %v148
  %v453 = vpop.f32.mrb[0].mxu0
  %v454 = vadd.f32 0.0, %v453
  %v455 = vpop.f32.mrb[0].mxu0
  %456 = vmatprep.mubr.f32.mxu0 0.0
  %457 = vmatmul.mubr.f32.gmra.mrb[0].mxu0 %v151
  %v458 = vpop.f32.mrb[0].mxu0
  %v459 = vadd.f32 0.0, %v458
  %v460 = vpop.f32.mrb[0].mxu0
  %461 = vmatprep.mubr.f32.mxu0 0.0
  %462 = vmatmul.mubr.f32.gmra.mrb[0].mxu0 %v154
  %v463 = vpop.f32.mrb[0].mxu0
  %v464 = vadd.f32 0.0, %v463
  %v465 = vpop.f32.mrb[0].mxu0
  %466 = vmatprep.mubr.f32.mxu0 0.0
  %467 = vmatmul.mubr.f32.gmra.mrb[0].mxu0 %v157
  %v468 = vpop.f32.mrb[0].mxu0
  %v469 = vadd.f32 0.0, %v468
  %v470 = vpop.f32.mrb[0].mxu0
  %471 = vmatprep.mubr.f32.mxu0 0.0
  %472 = vmatmul.mubr.f32.gmra.mrb[0].mxu0 %v160
  %v473 = vpop.f32.mrb[0].mxu0
  %v474 = vadd.f32 0.0, %v473
  %v475 = vpop.f32.mrb[0].mxu0
  %476 = vmatprep.mubr.f32.mxu0 0.0
  %477 = vmatmul.mubr.f32.gmra.mrb[0].mxu0 %v163
  %v478 = vpop.f32.mrb[0].mxu0
  %v479 = vadd.f32 0.0, %v478
  %v480 = vpop.f32.mrb[0].mxu0
  %481 = vmatprep.mubr.f32.mxu0 0.0
  %482 = vmatmul.mubr.f32.gmra.mrb[0].mxu0 %v166
  %v483 = vpop.f32.mrb[0].mxu0
  %v484 = vadd.f32 0.0, %v483
  %v485 = vpop.f32.mrb[0].mxu0
  %486 = vmatprep.mubr.f32.mxu0 0.0
  %487 = vmatmul.mubr.f32.gmra.mrb[0].mxu0 %v169
  %v488 = vpop.f32.mrb[0].mxu0
  %v489 = vadd.f32 0.0, %v488
  %v490 = vpop.f32.mrb[0].mxu0
  %491 = vmatprep.mubr.f32.mxu0 0.0
  %492 = vmatmul.mubr.f32.gmra.mrb[0].mxu0 %v172
  %v493 = vpop.f32.mrb[0].mxu0
  %v494 = vadd.f32 0.0, %v493
  %v495 = vpop.f32.mrb[0].mxu0
  %496 = vmatprep.mubr.f32.mxu0 0.0
  %497 = vmatmul.mubr.f32.gmra.mrb[0].mxu0 %v175
  %v498 = vpop.f32.mrb[0].mxu0
  %v499 = vadd.f32 0.0, %v498
  %v500 = vpop.f32.mrb[0].mxu0
  %501 = vmatprep.mubr.f32.mxu0 0.0
  %502 = vmatmul.mubr.f32.gmra.mrb[0].mxu0 %v178
  %v503 = vpop.f32.mrb[0].mxu0
  %v504 = vadd.f32 0.0, %v503
  %v505 = vpop.f32.mrb[0].mxu0
  %506 = vmatprep.mubr.f32.mxu0 0.0
  %507 = vmatmul.mubr.f32.gmra.mrb[0].mxu0 %v181
  %v508 = vpop.f32.mrb[0].mxu0
  %v509 = vadd.f32 0.0, %v508
  %v510 = vpop.f32.mrb[0].mxu0
  %511 = vmatprep.mubr.f32.mxu0 0.0
  %512 = vmatmul.mubr.f32.gmra.mrb[0].mxu0 %v184
  %v513 = vpop.f32.mrb[0].mxu0
  %v514 = vadd.f32 0.0, %v513
  %v515 = vpop.f32.mrb[0].mxu0
  %516 = vmatprep.mubr.f32.mxu0 0.0
  %517 = vmatmul.mubr.f32.gmra.mrb[0].mxu0 %v187
  %v518 = vpop.f32.mrb[0].mxu0
  %v519 = vadd.f32 0.0, %v518
  %v520 = vpop.f32.mrb[0].mxu0
  %521 = vmatprep.mubr.f32.mxu0 0.0
  %522 = vmatmul.mubr.f32.gmra.mrb[0].mxu0 %v190
  %v523 = vpop.f32.mrb[0].mxu0
  %v524 = vadd.f32 0.0, %v523
  %v525 = vpop.f32.mrb[0].mxu0
  %526 = vmatprep.mubr.f32.mxu0 0.0
  %527 = vmatmul.mubr.f32.gmra.mrb[0].mxu0 %v193
  %v528 = vpop.f32.mrb[0].mxu0
  %v529 = vadd.f32 0.0, %v528
  %v530 = vpop.f32.mrb[0].mxu0
  %531 = vmatprep.mubr.f32.mxu0 0.0
  %532 = vmatmul.mubr.f32.gmra.mrb[0].mxu0 %v196
  %v533 = vpop.f32.mrb[0].mxu0
  %v534 = vadd.f32 0.0, %v533
  %v535 = vpop.f32.mrb[0].mxu0
  %536 = vmatprep.mubr.f32.mxu0 0.0
  %537 = vmatmul.mubr.f32.gmra.mrb[0].mxu0 %v199
  %v538 = vpop.f32.mrb[0].mxu0
  %v539 = vadd.f32 0.0, %v538
  %v540 = vpop.f32.mrb[0].mxu0
  %541 = vmatprep.mubr.f32.mxu0 0.0
  %542 = vmatmul.mubr.f32.gmra.mrb[0].mxu0 %v202
  %v543 = vpop.f32.mrb[0].mxu0
  %v544 = vadd.f32 0.0, %v543
  %v545 = vpop.f32.mrb[0].mxu0
  %546 = vmatprep.mubr.f32.mxu0 0.0
  %547 = vmatmul.mubr.f32.gmra.mrb[0].mxu0 %v205
  %v548 = vpop.f32.mrb[0].mxu0
  %v549 = vadd.f32 0.0, %v548
  %v550 = vpop.f32.mrb[0].mxu0
  %551 = vmatprep.mubr.f32.mxu0 0.0
  %552 = vmatmul.mubr.f32.gmra.mrb[0].mxu0 %v208
  %v553 = vpop.f32.mrb[0].mxu0
  %v554 = vadd.f32 0.0, %v553
  %v555 = vpop.f32.mrb[0].mxu0
  %556 = vmatprep.mubr.f32.mxu0 0.0
  %557 = vmatmul.mubr.f32.gmra.mrb[0].mxu0 %v211
  %v558 = vpop.f32.mrb[0].mxu0
  %v559 = vadd.f32 0.0, %v558
  %v560 = vpop.f32.mrb[0].mxu0
  %561 = vmatprep.mubr.f32.mxu0 0.0
  %562 = vmatmul.mubr.f32.gmra.mrb[0].mxu0 %v214
  %v563 = vpop.f32.mrb[0].mxu0
  %v564 = vadd.f32 0.0, %v563
  %v565 = vpop.f32.mrb[0].mxu0
  %566 = vmatprep.mubr.f32.mxu0 0.0
  %567 = vmatmul.mubr.f32.gmra.mrb[0].mxu0 %v217
  %v568 = vpop.f32.mrb[0].mxu0
  %v569 = vadd.f32 0.0, %v568
  %v570 = vpop.f32.mrb[0].mxu0
  %571 = vmatprep.mubr.f32.mxu0 0.0
  %572 = vmatmul.mubr.f32.gmra.mrb[0].mxu0 %v220
  %v573 = vpop.f32.mrb[0].mxu0
  %v574 = vadd.f32 0.0, %v573
  %v575 = vpop.f32.mrb[0].mxu0
  %576 = vmatprep.mubr.f32.mxu0 0.0
  %577 = vmatmul.mubr.f32.gmra.mrb[0].mxu0 %v223
  %v578 = vpop.f32.mrb[0].mxu0
  %v579 = vadd.f32 0.0, %v578
  %v580 = vpop.f32.mrb[0].mxu0
  %581 = vmatprep.mubr.f32.mxu0 0.0
  %582 = vmatmul.mubr.f32.gmra.mrb[0].mxu0 %v226
  %v583 = vpop.f32.mrb[0].mxu0
  %v584 = vadd.f32 0.0, %v583
  %v585 = vpop.f32.mrb[0].mxu0
  %586 = vmatprep.mubr.f32.mxu0 0.0
  %587 = vmatmul.mubr.f32.gmra.mrb[0].mxu0 %v229
  %v588 = vpop.f32.mrb[0].mxu0
  %v589 = vadd.f32 0.0, %v588
  %v590 = vpop.f32.mrb[0].mxu0
  %591 = vmatprep.mubr.f32.mxu0 0.0
  %592 = vmatmul.mubr.f32.gmra.mrb[0].mxu0 %v232
  %v593 = vpop.f32.mrb[0].mxu0
  %v594 = vadd.f32 0.0, %v593
  %v595 = vpop.f32.mrb[0].mxu0
  %596 = vmatprep.mubr.f32.mxu0 0.0
  %597 = vmatmul.mubr.f32.gmra.mrb[0].mxu0 %v235
  %v598 = vpop.f32.mrb[0].mxu0
  %v599 = vadd.f32 0.0, %v598
  %v600 = vpop.f32.mrb[0].mxu0
  %601 = vmatprep.mubr.f32.mxu0 0.0
  %602 = vmatmul.mubr.f32.gmra.mrb[0].mxu0 %v238
  %v603 = vpop.f32.mrb[0].mxu0
  %v604 = vadd.f32 0.0, %v603
  %v605 = vpop.f32.mrb[0].mxu0
  %606 = vmatprep.mubr.f32.mxu0 0.0
  %607 = vmatmul.mubr.f32.gmra.mrb[0].mxu0 %v241
  %v608 = vpop.f32.mrb[0].mxu0
  %v609 = vadd.f32 0.0, %v608
  %v610 = vpop.f32.mrb[0].mxu0
  %611 = vmatprep.mubr.f32.mxu0 0.0
  %612 = vmatmul.mubr.f32.gmra.mrb[0].mxu0 %v244
  %v613 = vpop.f32.mrb[0].mxu0
  %v614 = vadd.f32 0.0, %v613
  %v615 = vpop.f32.mrb[0].mxu0
  %616 = vmatprep.mubr.f32.mxu0 0.0
  %617 = vmatmul.mubr.f32.gmra.mrb[0].mxu0 %v247
  %v618 = vpop.f32.mrb[0].mxu0
  %v619 = vadd.f32 0.0, %v618
  %v620 = vpop.f32.mrb[0].mxu0
  %621 = vmatprep.mubr.f32.mxu0 0.0
  %622 = vmatmul.mubr.f32.gmra.mrb[0].mxu0 %v250
  %v623 = vpop.f32.mrb[0].mxu0
  %v624 = vadd.f32 0.0, %v623
  %v625 = vpop.f32.mrb[0].mxu0
  %626 = vmatprep.mubr.f32.mxu0 0.0
  %627 = vmatmul.mubr.f32.gmra.mrb[0].mxu0 %v253
  %v628 = vpop.f32.mrb[0].mxu0
  %v629 = vadd.f32 0.0, %v628
  %v630 = vpop.f32.mrb[0].mxu0
  %631 = vmatprep.mubr.f32.mxu0 0.0
  %632 = vmatmul.mubr.f32.gmra.mrb[0].mxu0 %v256
  %v633 = vpop.f32.mrb[0].mxu0
  %v634 = vadd.f32 0.0, %v633
  %v635 = vpop.f32.mrb[0].mxu0
  %636 = vmatprep.mubr.f32.mxu0 0.0
  %637 = vmatmul.mubr.f32.gmra.mrb[0].mxu0 %v259
  %v638 = vpop.f32.mrb[0].mxu0
  %v639 = vadd.f32 0.0, %v638
  %v640 = vpop.f32.mrb[0].mxu0
  %641 = vmatprep.mubr.f32.mxu0 0.0
  %642 = vmatmul.mubr.f32.gmra.mrb[0].mxu0 %v262
  %v643 = vpop.f32.mrb[0].mxu0
  %v644 = vadd.f32 0.0, %v643
  %v645 = vpop.f32.mrb[0].mxu0
  %646 = vmatprep.mubr.f32.mxu0 0.0
  %647 = vmatmul.mubr.f32.gmra.mrb[0].mxu0 %v265
  %v648 = vpop.f32.mrb[0].mxu0
  %v649 = vadd.f32 0.0, %v648
  %v650 = vpop.f32.mrb[0].mxu0
  %651 = vmatprep.mubr.f32.mxu0 0.0
  %652 = vmatmul.mubr.f32.gmra.mrb[0].mxu0 %v268
  %v653 = vpop.f32.mrb[0].mxu0
  %v654 = vadd.f32 0.0, %v653
  %v655 = vpop.f32.mrb[0].mxu0
  %656 = vmatprep.mubr.f32.mxu0 0.0
  %657 = vmatmul.mubr.f32.gmra.mrb[0].mxu0 %v271
  %v658 = vpop.f32.mrb[0].mxu0
  %v659 = vadd.f32 0.0, %v658
  %v660 = vpop.f32.mrb[0].mxu0
  %661 = vdwg.mxu0
  %v662 = vadd.f32 %v344, %v349
  %v663 = vadd.f32 %v662, %v354
  %v664 = vadd.f32 %v663, %v359
  %v665 = vadd.f32 %v664, %v364
  %v666 = vadd.f32 %v665, %v369
  %v667 = vadd.f32 %v666, %v374
  %v668 = vadd.f32 %v667, %v379
  %v669 = vadd.f32 %v668, %v384
  %v670 = vadd.f32 %v669, %v389
  %v671 = vadd.f32 %v670, %v394
  %v672 = vadd.f32 %v671, %v399
  %v673 = vadd.f32 %v672, %v404
  %v674 = vadd.f32 %v673, %v409
  %v675 = vadd.f32 %v674, %v414
  %v676 = vadd.f32 %v675, %v419
  %v677 = vadd.f32 %v676, %v424
  %v678 = vadd.f32 %v677, %v429
  %v679 = vadd.f32 %v678, %v434
  %v680 = vadd.f32 %v679, %v439
  %v681 = vadd.f32 %v680, %v444
  %v682 = vadd.f32 %v681, %v449
  %v683 = vadd.f32 %v682, %v454
  %v684 = vadd.f32 %v683, %v459
  %v685 = vadd.f32 %v684, %v464
  %v686 = vadd.f32 %v685, %v469
  %v687 = vadd.f32 %v686, %v474
  %v688 = vadd.f32 %v687, %v479
  %v689 = vadd.f32 %v688, %v484
  %v690 = vadd.f32 %v689, %v489
  %v691 = vadd.f32 %v690, %v494
  %v692 = vadd.f32 %v691, %v499
  %v693 = vadd.f32 %v692, %v504
  %v694 = vadd.f32 %v693, %v509
  %v695 = vadd.f32 %v694, %v514
  %v696 = vadd.f32 %v695, %v519
  %v697 = vadd.f32 %v696, %v524
  %v698 = vadd.f32 %v697, %v529
  %v699 = vadd.f32 %v698, %v534
  %v700 = vadd.f32 %v699, %v539
  %v701 = vadd.f32 %v700, %v544
  %v702 = vadd.f32 %v701, %v549
  %v703 = vadd.f32 %v702, %v554
  %v704 = vadd.f32 %v703, %v559
  %v705 = vadd.f32 %v704, %v564
  %v706 = vadd.f32 %v705, %v569
  %v707 = vadd.f32 %v706, %v574
  %v708 = vadd.f32 %v707, %v579
  %v709 = vadd.f32 %v708, %v584
  %v710 = vadd.f32 %v709, %v589
  %v711 = vadd.f32 %v710, %v594
  %v712 = vadd.f32 %v711, %v599
  %v713 = vadd.f32 %v712, %v604
  %v714 = vadd.f32 %v713, %v609
  %v715 = vadd.f32 %v714, %v614
  %v716 = vadd.f32 %v715, %v619
  %v717 = vadd.f32 %v716, %v624
  %v718 = vadd.f32 %v717, %v629
  %v719 = vadd.f32 %v718, %v634
  %v720 = vadd.f32 %v719, %v639
  %v721 = vadd.f32 %v720, %v644
  %v722 = vadd.f32 %v721, %v649
  %v723 = vadd.f32 %v722, %v654
  %v724 = vadd.f32 %v723, %v659
  %v725 = vrot.slane %v724, 4
  %v726 = vadd.f32 %v724, %v725
  %v727 = vrot.slane %v726, 2
  %v728 = vadd.f32 %v726, %v727
  %v729 = vrot.slane %v728, 1
  %v730 = vadd.f32 %v728, %v729
  %731 = vst [vmem:[%s2] sm:$0x1] %v730
  %v732 = vmul.f32 %v344, %v344
  %v733 = vmul.f32 %v349, %v349
  %v734 = vmul.f32 %v354, %v354
  %v735 = vmul.f32 %v359, %v359
  %v736 = vmul.f32 %v364, %v364
  %v737 = vmul.f32 %v369, %v369
  %v738 = vmul.f32 %v374, %v374
  %v739 = vmul.f32 %v379, %v379
  %v740 = vmul.f32 %v384, %v384
  %v741 = vmul.f32 %v389, %v389
  %v742 = vmul.f32 %v394, %v394
  %v743 = vmul.f32 %v399, %v399
  %v744 = vmul.f32 %v404, %v404
  %v745 = vmul.f32 %v409, %v409
  %v746 = vmul.f32 %v414, %v414
  %v747 = vmul.f32 %v419, %v419
  %v748 = vmul.f32 %v424, %v424
  %v749 = vmul.f32 %v429, %v429
  %v750 = vmul.f32 %v434, %v434
  %v751 = vmul.f32 %v439, %v439
  %v752 = vmul.f32 %v444, %v444
  %v753 = vmul.f32 %v449, %v449
  %v754 = vmul.f32 %v454, %v454
  %v755 = vmul.f32 %v459, %v459
  %v756 = vmul.f32 %v464, %v464
  %v757 = vmul.f32 %v469, %v469
  %v758 = vmul.f32 %v474, %v474
  %v759 = vmul.f32 %v479, %v479
  %v760 = vmul.f32 %v484, %v484
  %v761 = vmul.f32 %v489, %v489
  %v762 = vmul.f32 %v494, %v494
  %v763 = vmul.f32 %v499, %v499
  %v764 = vmul.f32 %v504, %v504
  %v765 = vmul.f32 %v509, %v509
  %v766 = vmul.f32 %v514, %v514
  %v767 = vmul.f32 %v519, %v519
  %v768 = vmul.f32 %v524, %v524
  %v769 = vmul.f32 %v529, %v529
  %v770 = vmul.f32 %v534, %v534
  %v771 = vmul.f32 %v539, %v539
  %v772 = vmul.f32 %v544, %v544
  %v773 = vmul.f32 %v549, %v549
  %v774 = vmul.f32 %v554, %v554
  %v775 = vmul.f32 %v559, %v559
  %v776 = vmul.f32 %v564, %v564
  %v777 = vmul.f32 %v569, %v569
  %v778 = vmul.f32 %v574, %v574
  %v779 = vmul.f32 %v579, %v579
  %v780 = vmul.f32 %v584, %v584
  %v781 = vmul.f32 %v589, %v589
  %v782 = vmul.f32 %v594, %v594
  %v783 = vmul.f32 %v599, %v599
  %v784 = vmul.f32 %v604, %v604
  %v785 = vmul.f32 %v609, %v609
  %v786 = vmul.f32 %v614, %v614
  %v787 = vmul.f32 %v619, %v619
  %v788 = vmul.f32 %v624, %v624
  %v789 = vmul.f32 %v629, %v629
  %v790 = vmul.f32 %v634, %v634
  %v791 = vmul.f32 %v639, %v639
  %v792 = vmul.f32 %v644, %v644
  %v793 = vmul.f32 %v649, %v649
  %v794 = vmul.f32 %v654, %v654
  %v795 = vmul.f32 %v659, %v659
  %v796 = vadd.f32 %v732, %v733
  %v797 = vadd.f32 %v796, %v734
  %v798 = vadd.f32 %v797, %v735
  %v799 = vadd.f32 %v798, %v736
  %v800 = vadd.f32 %v799, %v737
  %v801 = vadd.f32 %v800, %v738
  %v802 = vadd.f32 %v801, %v739
  %v803 = vadd.f32 %v802, %v740
  %v804 = vadd.f32 %v803, %v741
  %v805 = vadd.f32 %v804, %v742
  %v806 = vadd.f32 %v805, %v743
  %v807 = vadd.f32 %v806, %v744
  %v808 = vadd.f32 %v807, %v745
  %v809 = vadd.f32 %v808, %v746
  %v810 = vadd.f32 %v809, %v747
  %v811 = vadd.f32 %v810, %v748
  %v812 = vadd.f32 %v811, %v749
  %v813 = vadd.f32 %v812, %v750
  %v814 = vadd.f32 %v813, %v751
  %v815 = vadd.f32 %v814, %v752
  %v816 = vadd.f32 %v815, %v753
  %v817 = vadd.f32 %v816, %v754
  %v818 = vadd.f32 %v817, %v755
  %v819 = vadd.f32 %v818, %v756
  %v820 = vadd.f32 %v819, %v757
  %v821 = vadd.f32 %v820, %v758
  %v822 = vadd.f32 %v821, %v759
  %v823 = vadd.f32 %v822, %v760
  %v824 = vadd.f32 %v823, %v761
  %v825 = vadd.f32 %v824, %v762
  %v826 = vadd.f32 %v825, %v763
  %v827 = vadd.f32 %v826, %v764
  %v828 = vadd.f32 %v827, %v765
  %v829 = vadd.f32 %v828, %v766
  %v830 = vadd.f32 %v829, %v767
  %v831 = vadd.f32 %v830, %v768
  %v832 = vadd.f32 %v831, %v769
  %v833 = vadd.f32 %v832, %v770
  %v834 = vadd.f32 %v833, %v771
  %v835 = vadd.f32 %v834, %v772
  %v836 = vadd.f32 %v835, %v773
  %v837 = vadd.f32 %v836, %v774
  %v838 = vadd.f32 %v837, %v775
  %v839 = vadd.f32 %v838, %v776
  %v840 = vadd.f32 %v839, %v777
  %v841 = vadd.f32 %v840, %v778
  %v842 = vadd.f32 %v841, %v779
  %v843 = vadd.f32 %v842, %v780
  %v844 = vadd.f32 %v843, %v781
  %v845 = vadd.f32 %v844, %v782
  %v846 = vadd.f32 %v845, %v783
  %v847 = vadd.f32 %v846, %v784
  %v848 = vadd.f32 %v847, %v785
  %v849 = vadd.f32 %v848, %v786
  %v850 = vadd.f32 %v849, %v787
  %v851 = vadd.f32 %v850, %v788
  %v852 = vadd.f32 %v851, %v789
  %v853 = vadd.f32 %v852, %v790
  %v854 = vadd.f32 %v853, %v791
  %v855 = vadd.f32 %v854, %v792
  %v856 = vadd.f32 %v855, %v793
  %v857 = vadd.f32 %v856, %v794
  %v858 = vadd.f32 %v857, %v795
  %v859 = vrot.slane %v858, 4
  %v860 = vadd.f32 %v858, %v859
  %v861 = vrot.slane %v860, 2
  %v862 = vadd.f32 %v860, %v861
  %v863 = vrot.slane %v862, 1
  %v864 = vadd.f32 %v862, %v863
  %865 = vst [vmem:[%s2 + $0x1] sm:$0x1] %v864
  // Predicated region
  $region10: #{_lambda_.2} parent=0 // pred_check
    _
  $region11: #{_lambda_.2} parent=0 // pred_check_branch
    %867 = sbr.rel (0) target = $region13
  $region12: #{_lambda_.2} parent=0 // pred_region
    _
  $region13: #{_lambda_.2} parent=0 // pred_fallthru
    _
  // Predicated region
  $region14: #{_lambda_.2} parent=0 // pred_check
    _
  $region15: #{_lambda_.2} parent=0 // pred_check_branch
    %869 = sbr.rel (0) target = $region17
  $region16: #{_lambda_.2} parent=0 // pred_region
    _
  $region17: #{_lambda_.2} parent=0 // pred_fallthru
    _

// kernel: _lambda_.3
$region0: #{_lambda_.3}
  #allocation0 [shape = 'u32[]', space=smem, size = 0x4, offset = 0x4, fixed_abs, tag = 'smem constant byte address 0x4 - core index']
  #allocation1 [shape = 'u32[144,128]{1,0:T(1,128)}', space=vmem, size = 0x12000, scoped, tag = 'internal scratch']
  %s0 = inlined_call_operand.vmem [shape: f32[512,36], index: 0, kind: input, shape index: {}]
  %s1 = inlined_call_operand.vmem [shape: f32[36,128], index: 1, kind: input, shape index: {}]
  %s2 = inlined_call_operand.vmem [shape: f32[1,8], index: 2, kind: input, shape index: {}]
  %s3 = inlined_call_operand.vmem [shape: f32[1,8], index: 3, kind: input, shape index: {}]
  %s4 = inlined_call_operand.vmem [shape: f32[512,8], index: 4, kind: output, shape index: {}]
  %s5 = sld [smem:[#allocation0]]
  $region26: #{_lambda_.3} parent=0
    _
  %s7 = ssub.s32 1, %s5
  %s8 = scalar_select 0, %s7, %s5
  // Predicated region
  $region2: #{_lambda_.3} parent=0 // pred_check
    _
  $region3: #{_lambda_.3} parent=0 // pred_check_branch
    %10 = sbr.rel (0) target = $region5
  $region4: #{_lambda_.3} parent=0 // pred_region
    _
  $region5: #{_lambda_.3} parent=0 // pred_fallthru
    _
  // Predicated region
  $region6: #{_lambda_.3} parent=0 // pred_check
    _
  $region7: #{_lambda_.3} parent=0 // pred_check_branch
    %12 = sbr.rel (0) target = $region9
  $region8: #{_lambda_.3} parent=0 // pred_region
    _
  $region9: #{_lambda_.3} parent=0 // pred_fallthru
    _
  // Predicated region
  $region10: #{_lambda_.3} parent=0 // pred_check
    _
  $region11: #{_lambda_.3} parent=0 // pred_check_branch
    %14 = sbr.rel (0) target = $region13
  $region12: #{_lambda_.3} parent=0 // pred_region
    _
  $region13: #{_lambda_.3} parent=0 // pred_fallthru
    _
  // Predicated region
  $region14: #{_lambda_.3} parent=0 // pred_check
    _
  $region15: #{_lambda_.3} parent=0 // pred_check_branch
    %16 = sbr.rel (0) target = $region17
  $region16: #{_lambda_.3} parent=0 // pred_region
    _
  $region17: #{_lambda_.3} parent=0 // pred_fallthru
    _
  %v17 = vld [vmem:[%s0] sm:$0xff]
  %v18 = vld [vmem:[%s0 + $0x8] sm:$0xff]
  %v19 = vld [vmem:[%s0 + $0x10] sm:$0xff]
  %v20 = vld [vmem:[%s0 + $0x18] sm:$0xff]
  %v21 = vld [vmem:[%s0 + $0x20] sm:$0xff]
  %v22 = vld [vmem:[%s0 + $0x28] sm:$0xff]
  %v23 = vld [vmem:[%s0 + $0x30] sm:$0xff]
  %v24 = vld [vmem:[%s0 + $0x38] sm:$0xff]
  %v25 = vld [vmem:[%s0 + $0x40] sm:$0xff]
  %v26 = vld [vmem:[%s0 + $0x48] sm:$0xff]
  %v27 = vld [vmem:[%s0 + $0x50] sm:$0xff]
  %v28 = vld [vmem:[%s0 + $0x58] sm:$0xff]
  %v29 = vld [vmem:[%s0 + $0x60] sm:$0xff]
  %v30 = vld [vmem:[%s0 + $0x68] sm:$0xff]
  %v31 = vld [vmem:[%s0 + $0x70] sm:$0xff]
  %v32 = vld [vmem:[%s0 + $0x78] sm:$0xff]
  %v33 = vld [vmem:[%s0 + $0x80] sm:$0xff]
  %v34 = vld [vmem:[%s0 + $0x88] sm:$0xff]
  %v35 = vld [vmem:[%s0 + $0x90] sm:$0xff]
  %v36 = vld [vmem:[%s0 + $0x98] sm:$0xff]
  %v37 = vld [vmem:[%s0 + $0xa0] sm:$0xff]
  %v38 = vld [vmem:[%s0 + $0xa8] sm:$0xff]
  %v39 = vld [vmem:[%s0 + $0xb0] sm:$0xff]
  %v40 = vld [vmem:[%s0 + $0xb8] sm:$0xff]
  %v41 = vld [vmem:[%s0 + $0xc0] sm:$0xff]
  %v42 = vld [vmem:[%s0 + $0xc8] sm:$0xff]
  %v43 = vld [vmem:[%s0 + $0xd0] sm:$0xff]
  %v44 = vld [vmem:[%s0 + $0xd8] sm:$0xff]
  %v45 = vld [vmem:[%s0 + $0xe0] sm:$0xff]
  %v46 = vld [vmem:[%s0 + $0xe8] sm:$0xff]
  %v47 = vld [vmem:[%s0 + $0xf0] sm:$0xff]
  %v48 = vld [vmem:[%s0 + $0xf8] sm:$0xff]
  %v49 = vld [vmem:[%s0 + $0x100] sm:$0xff]
  %v50 = vld [vmem:[%s0 + $0x108] sm:$0xff]
  %v51 = vld [vmem:[%s0 + $0x110] sm:$0xff]
  %v52 = vld [vmem:[%s0 + $0x118] sm:$0xff]
  %v53 = vld [vmem:[%s0 + $0x120] sm:$0xff]
  %v54 = vld [vmem:[%s0 + $0x128] sm:$0xff]
  %v55 = vld [vmem:[%s0 + $0x130] sm:$0xff]
  %v56 = vld [vmem:[%s0 + $0x138] sm:$0xff]
  %v57 = vld [vmem:[%s0 + $0x140] sm:$0xff]
  %v58 = vld [vmem:[%s0 + $0x148] sm:$0xff]
  %v59 = vld [vmem:[%s0 + $0x150] sm:$0xff]
  %v60 = vld [vmem:[%s0 + $0x158] sm:$0xff]
  %v61 = vld [vmem:[%s0 + $0x160] sm:$0xff]
  %v62 = vld [vmem:[%s0 + $0x168] sm:$0xff]
  %v63 = vld [vmem:[%s0 + $0x170] sm:$0xff]
  %v64 = vld [vmem:[%s0 + $0x178] sm:$0xff]
  %v65 = vld [vmem:[%s0 + $0x180] sm:$0xff]
  %v66 = vld [vmem:[%s0 + $0x188] sm:$0xff]
  %v67 = vld [vmem:[%s0 + $0x190] sm:$0xff]
  %v68 = vld [vmem:[%s0 + $0x198] sm:$0xff]
  %v69 = vld [vmem:[%s0 + $0x1a0] sm:$0xff]
  %v70 = vld [vmem:[%s0 + $0x1a8] sm:$0xff]
  %v71 = vld [vmem:[%s0 + $0x1b0] sm:$0xff]
  %v72 = vld [vmem:[%s0 + $0x1b8] sm:$0xff]
  %v73 = vld [vmem:[%s0 + $0x1c0] sm:$0xff]
  %v74 = vld [vmem:[%s0 + $0x1c8] sm:$0xff]
  %v75 = vld [vmem:[%s0 + $0x1d0] sm:$0xff]
  %v76 = vld [vmem:[%s0 + $0x1d8] sm:$0xff]
  %v77 = vld [vmem:[%s0 + $0x1e0] sm:$0xff]
  %v78 = vld [vmem:[%s0 + $0x1e8] sm:$0xff]
  %v79 = vld [vmem:[%s0 + $0x1f0] sm:$0xff]
  %v80 = vld [vmem:[%s0 + $0x1f8] sm:$0xff]
  %v81 = vld [vmem:[%s1] sm:$0xff]
  %v82 = vld [vmem:[%s1 + $0x8] sm:$0xff]
  %v83 = vld [vmem:[%s1 + $0x10] sm:$0xff]
  %v84 = vld [vmem:[%s1 + $0x18] sm:$0xff]
  %v85 = vld [vmem:[%s1 + $0x20] sm:$0xf]
  %vm86 = vcmask 293888
  %v88 = vsel %vm86, %v17, 0
  %v91 = vsel %vm86, %v18, 0
  %v94 = vsel %vm86, %v19, 0
  %v97 = vsel %vm86, %v20, 0
  %v100 = vsel %vm86, %v21, 0
  %v103 = vsel %vm86, %v22, 0
  %v106 = vsel %vm86, %v23, 0
  %v109 = vsel %vm86, %v24, 0
  %v112 = vsel %vm86, %v25, 0
  %v115 = vsel %vm86, %v26, 0
  %v118 = vsel %vm86, %v27, 0
  %v121 = vsel %vm86, %v28, 0
  %v124 = vsel %vm86, %v29, 0
  %v127 = vsel %vm86, %v30, 0
  %v130 = vsel %vm86, %v31, 0
  %v133 = vsel %vm86, %v32, 0
  %v136 = vsel %vm86, %v33, 0
  %v139 = vsel %vm86, %v34, 0
  %v142 = vsel %vm86, %v35, 0
  %v145 = vsel %vm86, %v36, 0
  %v148 = vsel %vm86, %v37, 0
  %v151 = vsel %vm86, %v38, 0
  %v154 = vsel %vm86, %v39, 0
  %v157 = vsel %vm86, %v40, 0
  %v160 = vsel %vm86, %v41, 0
  %v163 = vsel %vm86, %v42, 0
  %v166 = vsel %vm86, %v43, 0
  %v169 = vsel %vm86, %v44, 0
  %v172 = vsel %vm86, %v45, 0
  %v175 = vsel %vm86, %v46, 0
  %v178 = vsel %vm86, %v47, 0
  %v181 = vsel %vm86, %v48, 0
  %v184 = vsel %vm86, %v49, 0
  %v187 = vsel %vm86, %v50, 0
  %v190 = vsel %vm86, %v51, 0
  %v193 = vsel %vm86, %v52, 0
  %v196 = vsel %vm86, %v53, 0
  %v199 = vsel %vm86, %v54, 0
  %v202 = vsel %vm86, %v55, 0
  %v205 = vsel %vm86, %v56, 0
  %v208 = vsel %vm86, %v57, 0
  %v211 = vsel %vm86, %v58, 0
  %v214 = vsel %vm86, %v59, 0
  %v217 = vsel %vm86, %v60, 0
  %v220 = vsel %vm86, %v61, 0
  %v223 = vsel %vm86, %v62, 0
  %v226 = vsel %vm86, %v63, 0
  %v229 = vsel %vm86, %v64, 0
  %v232 = vsel %vm86, %v65, 0
  %v235 = vsel %vm86, %v66, 0
  %v238 = vsel %vm86, %v67, 0
  %v241 = vsel %vm86, %v68, 0
  %v244 = vsel %vm86, %v69, 0
  %v247 = vsel %vm86, %v70, 0
  %v250 = vsel %vm86, %v71, 0
  %v253 = vsel %vm86, %v72, 0
  %v256 = vsel %vm86, %v73, 0
  %v259 = vsel %vm86, %v74, 0
  %v262 = vsel %vm86, %v75, 0
  %v265 = vsel %vm86, %v76, 0
  %v268 = vsel %vm86, %v77, 0
  %v271 = vsel %vm86, %v78, 0
  %v274 = vsel %vm86, %v79, 0
  %v277 = vsel %vm86, %v80, 0
  %vm279 = vcmask 1043456
  %v281 = vsel %vm279, %v85, 0
  %283 = vmatprep.subr.mxu0 0.0
  %284 = vmatpush1.msra.mxu0 %v81
  %285 = vmatprep.subr.mxu0 0.0
  %286 = vmatpush1.msra.mxu0 %v82
  %287 = vmatprep.subr.mxu0 0.0
  %288 = vmatpush1.msra.mxu0 %v83
  %289 = vmatprep.subr.mxu0 0.0
  %290 = vmatpush1.msra.mxu0 %v84
  %291 = vmatprep.subr.mxu0 0.0
  %292 = vmatpush1.msra.mxu0 %v281
  %293 = vmatprep.subr.mxu0 0.0
  %294 = vmatpush1.msra.mxu0 0.0
  %295 = vmatprep.subr.mxu0 0.0
  %296 = vmatpush1.msra.mxu0 0.0
  %297 = vmatprep.subr.mxu0 0.0
  %298 = vmatpush1.msra.mxu0 0.0
  %299 = vmatprep.subr.mxu0 0.0
  %300 = vmatpush1.msra.mxu0 0.0
  %301 = vmatprep.subr.mxu0 0.0
  %302 = vmatpush1.msra.mxu0 0.0
  %303 = vmatprep.subr.mxu0 0.0
  %304 = vmatpush1.msra.mxu0 0.0
  %305 = vmatprep.subr.mxu0 0.0
  %306 = vmatpush1.msra.mxu0 0.0
  %307 = vmatprep.subr.mxu0 0.0
  %308 = vmatpush1.msra.mxu0 0.0
  %309 = vmatprep.subr.mxu0 0.0
  %310 = vmatpush1.msra.mxu0 0.0
  %311 = vmatprep.subr.mxu0 0.0
  %312 = vmatpush1.msra.mxu0 0.0
  %313 = vmatprep.subr.mxu0 0.0
  %314 = vmatpush1.msra.mxu0 0.0
  %315 = vmatprep.subr.mxu0 0.0
  %316 = vmatpush1.msra.mxu0 0.0
  %317 = vmatprep.subr.mxu0 0.0
  %318 = vmatpush1.msra.mxu0 0.0
  %319 = vmatprep.subr.mxu0 0.0
  %320 = vmatpush1.msra.mxu0 0.0
  %321 = vmatprep.subr.mxu0 0.0
  %322 = vmatpush1.msra.mxu0 0.0
  %323 = vmatprep.subr.mxu0 0.0
  %324 = vmatpush1.msra.mxu0 0.0
  %325 = vmatprep.subr.mxu0 0.0
  %326 = vmatpush1.msra.mxu0 0.0
  %327 = vmatprep.subr.mxu0 0.0
  %328 = vmatpush1.msra.mxu0 0.0
  %329 = vmatprep.subr.mxu0 0.0
  %330 = vmatpush1.msra.mxu0 0.0
  %331 = vmatprep.subr.mxu0 0.0
  %332 = vmatpush1.msra.mxu0 0.0
  %333 = vmatprep.subr.mxu0 0.0
  %334 = vmatpush1.msra.mxu0 0.0
  %335 = vmatprep.subr.mxu0 0.0
  %336 = vmatpush1.msra.mxu0 0.0
  %337 = vmatprep.subr.mxu0 0.0
  %338 = vmatpush1.msra.mxu0 0.0
  %339 = vmatprep.subr.mxu0 0.0
  %340 = vmatpush1.msra.mxu0 0.0
  %341 = vmatprep.subr.mxu0 0.0
  %342 = vmatpush1.msra.mxu0 0.0
  %343 = vmatprep.subr.mxu0 0.0
  %344 = vmatpush1.msra.mxu0 0.0
  %345 = vmatprep.subr.mxu0 0.0
  %346 = vmatpush1.msra.mxu0 0.0
  %347 = vmatprep.mubr.f32.mxu0 0.0
  %348 = vmatmul.mubr.f32.gmra.mrb[0].mxu0 %v88
  %v349 = vpop.f32.mrb[0].mxu0
  %v350 = vadd.f32 0.0, %v349
  %v351 = vpop.f32.mrb[0].mxu0
  %352 = vmatprep.mubr.f32.mxu0 0.0
  %353 = vmatmul.mubr.f32.gmra.mrb[0].mxu0 %v91
  %v354 = vpop.f32.mrb[0].mxu0
  %v355 = vadd.f32 0.0, %v354
  %v356 = vpop.f32.mrb[0].mxu0
  %357 = vmatprep.mubr.f32.mxu0 0.0
  %358 = vmatmul.mubr.f32.gmra.mrb[0].mxu0 %v94
  %v359 = vpop.f32.mrb[0].mxu0
  %v360 = vadd.f32 0.0, %v359
  %v361 = vpop.f32.mrb[0].mxu0
  %362 = vmatprep.mubr.f32.mxu0 0.0
  %363 = vmatmul.mubr.f32.gmra.mrb[0].mxu0 %v97
  %v364 = vpop.f32.mrb[0].mxu0
  %v365 = vadd.f32 0.0, %v364
  %v366 = vpop.f32.mrb[0].mxu0
  %367 = vmatprep.mubr.f32.mxu0 0.0
  %368 = vmatmul.mubr.f32.gmra.mrb[0].mxu0 %v100
  %v369 = vpop.f32.mrb[0].mxu0
  %v370 = vadd.f32 0.0, %v369
  %v371 = vpop.f32.mrb[0].mxu0
  %372 = vmatprep.mubr.f32.mxu0 0.0
  %373 = vmatmul.mubr.f32.gmra.mrb[0].mxu0 %v103
  %v374 = vpop.f32.mrb[0].mxu0
  %v375 = vadd.f32 0.0, %v374
  %v376 = vpop.f32.mrb[0].mxu0
  %377 = vmatprep.mubr.f32.mxu0 0.0
  %378 = vmatmul.mubr.f32.gmra.mrb[0].mxu0 %v106
  %v379 = vpop.f32.mrb[0].mxu0
  %v380 = vadd.f32 0.0, %v379
  %v381 = vpop.f32.mrb[0].mxu0
  %382 = vmatprep.mubr.f32.mxu0 0.0
  %383 = vmatmul.mubr.f32.gmra.mrb[0].mxu0 %v109
  %v384 = vpop.f32.mrb[0].mxu0
  %v385 = vadd.f32 0.0, %v384
  %v386 = vpop.f32.mrb[0].mxu0
  %387 = vmatprep.mubr.f32.mxu0 0.0
  %388 = vmatmul.mubr.f32.gmra.mrb[0].mxu0 %v112
  %v389 = vpop.f32.mrb[0].mxu0
  %v390 = vadd.f32 0.0, %v389
  %v391 = vpop.f32.mrb[0].mxu0
  %392 = vmatprep.mubr.f32.mxu0 0.0
  %393 = vmatmul.mubr.f32.gmra.mrb[0].mxu0 %v115
  %v394 = vpop.f32.mrb[0].mxu0
  %v395 = vadd.f32 0.0, %v394
  %v396 = vpop.f32.mrb[0].mxu0
  %397 = vmatprep.mubr.f32.mxu0 0.0
  %398 = vmatmul.mubr.f32.gmra.mrb[0].mxu0 %v118
  %v399 = vpop.f32.mrb[0].mxu0
  %v400 = vadd.f32 0.0, %v399
  %v401 = vpop.f32.mrb[0].mxu0
  %402 = vmatprep.mubr.f32.mxu0 0.0
  %403 = vmatmul.mubr.f32.gmra.mrb[0].mxu0 %v121
  %v404 = vpop.f32.mrb[0].mxu0
  %v405 = vadd.f32 0.0, %v404
  %v406 = vpop.f32.mrb[0].mxu0
  %407 = vmatprep.mubr.f32.mxu0 0.0
  %408 = vmatmul.mubr.f32.gmra.mrb[0].mxu0 %v124
  %v409 = vpop.f32.mrb[0].mxu0
  %v410 = vadd.f32 0.0, %v409
  %v411 = vpop.f32.mrb[0].mxu0
  %412 = vmatprep.mubr.f32.mxu0 0.0
  %413 = vmatmul.mubr.f32.gmra.mrb[0].mxu0 %v127
  %v414 = vpop.f32.mrb[0].mxu0
  %v415 = vadd.f32 0.0, %v414
  %v416 = vpop.f32.mrb[0].mxu0
  %417 = vmatprep.mubr.f32.mxu0 0.0
  %418 = vmatmul.mubr.f32.gmra.mrb[0].mxu0 %v130
  %v419 = vpop.f32.mrb[0].mxu0
  %v420 = vadd.f32 0.0, %v419
  %v421 = vpop.f32.mrb[0].mxu0
  %422 = vmatprep.mubr.f32.mxu0 0.0
  %423 = vmatmul.mubr.f32.gmra.mrb[0].mxu0 %v133
  %v424 = vpop.f32.mrb[0].mxu0
  %v425 = vadd.f32 0.0, %v424
  %v426 = vpop.f32.mrb[0].mxu0
  %427 = vmatprep.mubr.f32.mxu0 0.0
  %428 = vmatmul.mubr.f32.gmra.mrb[0].mxu0 %v136
  %v429 = vpop.f32.mrb[0].mxu0
  %v430 = vadd.f32 0.0, %v429
  %v431 = vpop.f32.mrb[0].mxu0
  %432 = vmatprep.mubr.f32.mxu0 0.0
  %433 = vmatmul.mubr.f32.gmra.mrb[0].mxu0 %v139
  %v434 = vpop.f32.mrb[0].mxu0
  %v435 = vadd.f32 0.0, %v434
  %v436 = vpop.f32.mrb[0].mxu0
  %437 = vmatprep.mubr.f32.mxu0 0.0
  %438 = vmatmul.mubr.f32.gmra.mrb[0].mxu0 %v142
  %v439 = vpop.f32.mrb[0].mxu0
  %v440 = vadd.f32 0.0, %v439
  %v441 = vpop.f32.mrb[0].mxu0
  %442 = vmatprep.mubr.f32.mxu0 0.0
  %443 = vmatmul.mubr.f32.gmra.mrb[0].mxu0 %v145
  %v444 = vpop.f32.mrb[0].mxu0
  %v445 = vadd.f32 0.0, %v444
  %v446 = vpop.f32.mrb[0].mxu0
  %447 = vmatprep.mubr.f32.mxu0 0.0
  %448 = vmatmul.mubr.f32.gmra.mrb[0].mxu0 %v148
  %v449 = vpop.f32.mrb[0].mxu0
  %v450 = vadd.f32 0.0, %v449
  %v451 = vpop.f32.mrb[0].mxu0
  %452 = vmatprep.mubr.f32.mxu0 0.0
  %453 = vmatmul.mubr.f32.gmra.mrb[0].mxu0 %v151
  %v454 = vpop.f32.mrb[0].mxu0
  %v455 = vadd.f32 0.0, %v454
  %v456 = vpop.f32.mrb[0].mxu0
  %457 = vmatprep.mubr.f32.mxu0 0.0
  %458 = vmatmul.mubr.f32.gmra.mrb[0].mxu0 %v154
  %v459 = vpop.f32.mrb[0].mxu0
  %v460 = vadd.f32 0.0, %v459
  %v461 = vpop.f32.mrb[0].mxu0
  %462 = vmatprep.mubr.f32.mxu0 0.0
  %463 = vmatmul.mubr.f32.gmra.mrb[0].mxu0 %v157
  %v464 = vpop.f32.mrb[0].mxu0
  %v465 = vadd.f32 0.0, %v464
  %v466 = vpop.f32.mrb[0].mxu0
  %467 = vmatprep.mubr.f32.mxu0 0.0
  %468 = vmatmul.mubr.f32.gmra.mrb[0].mxu0 %v160
  %v469 = vpop.f32.mrb[0].mxu0
  %v470 = vadd.f32 0.0, %v469
  %v471 = vpop.f32.mrb[0].mxu0
  %472 = vmatprep.mubr.f32.mxu0 0.0
  %473 = vmatmul.mubr.f32.gmra.mrb[0].mxu0 %v163
  %v474 = vpop.f32.mrb[0].mxu0
  %v475 = vadd.f32 0.0, %v474
  %v476 = vpop.f32.mrb[0].mxu0
  %477 = vmatprep.mubr.f32.mxu0 0.0
  %478 = vmatmul.mubr.f32.gmra.mrb[0].mxu0 %v166
  %v479 = vpop.f32.mrb[0].mxu0
  %v480 = vadd.f32 0.0, %v479
  %v481 = vpop.f32.mrb[0].mxu0
  %482 = vmatprep.mubr.f32.mxu0 0.0
  %483 = vmatmul.mubr.f32.gmra.mrb[0].mxu0 %v169
  %v484 = vpop.f32.mrb[0].mxu0
  %v485 = vadd.f32 0.0, %v484
  %v486 = vpop.f32.mrb[0].mxu0
  %487 = vmatprep.mubr.f32.mxu0 0.0
  %488 = vmatmul.mubr.f32.gmra.mrb[0].mxu0 %v172
  %v489 = vpop.f32.mrb[0].mxu0
  %v490 = vadd.f32 0.0, %v489
  %v491 = vpop.f32.mrb[0].mxu0
  %492 = vmatprep.mubr.f32.mxu0 0.0
  %493 = vmatmul.mubr.f32.gmra.mrb[0].mxu0 %v175
  %v494 = vpop.f32.mrb[0].mxu0
  %v495 = vadd.f32 0.0, %v494
  %v496 = vpop.f32.mrb[0].mxu0
  %497 = vmatprep.mubr.f32.mxu0 0.0
  %498 = vmatmul.mubr.f32.gmra.mrb[0].mxu0 %v178
  %v499 = vpop.f32.mrb[0].mxu0
  %v500 = vadd.f32 0.0, %v499
  %v501 = vpop.f32.mrb[0].mxu0
  %502 = vmatprep.mubr.f32.mxu0 0.0
  %503 = vmatmul.mubr.f32.gmra.mrb[0].mxu0 %v181
  %v504 = vpop.f32.mrb[0].mxu0
  %v505 = vadd.f32 0.0, %v504
  %v506 = vpop.f32.mrb[0].mxu0
  %507 = vmatprep.mubr.f32.mxu0 0.0
  %508 = vmatmul.mubr.f32.gmra.mrb[0].mxu0 %v184
  %v509 = vpop.f32.mrb[0].mxu0
  %v510 = vadd.f32 0.0, %v509
  %v511 = vpop.f32.mrb[0].mxu0
  %512 = vmatprep.mubr.f32.mxu0 0.0
  %513 = vmatmul.mubr.f32.gmra.mrb[0].mxu0 %v187
  %v514 = vpop.f32.mrb[0].mxu0
  %v515 = vadd.f32 0.0, %v514
  %v516 = vpop.f32.mrb[0].mxu0
  %517 = vmatprep.mubr.f32.mxu0 0.0
  %518 = vmatmul.mubr.f32.gmra.mrb[0].mxu0 %v190
  %v519 = vpop.f32.mrb[0].mxu0
  %v520 = vadd.f32 0.0, %v519
  %v521 = vpop.f32.mrb[0].mxu0
  %522 = vmatprep.mubr.f32.mxu0 0.0
  %523 = vmatmul.mubr.f32.gmra.mrb[0].mxu0 %v193
  %v524 = vpop.f32.mrb[0].mxu0
  %v525 = vadd.f32 0.0, %v524
  %v526 = vpop.f32.mrb[0].mxu0
  %527 = vmatprep.mubr.f32.mxu0 0.0
  %528 = vmatmul.mubr.f32.gmra.mrb[0].mxu0 %v196
  %v529 = vpop.f32.mrb[0].mxu0
  %v530 = vadd.f32 0.0, %v529
  %v531 = vpop.f32.mrb[0].mxu0
  %532 = vmatprep.mubr.f32.mxu0 0.0
  %533 = vmatmul.mubr.f32.gmra.mrb[0].mxu0 %v199
  %v534 = vpop.f32.mrb[0].mxu0
  %v535 = vadd.f32 0.0, %v534
  %v536 = vpop.f32.mrb[0].mxu0
  %537 = vmatprep.mubr.f32.mxu0 0.0
  %538 = vmatmul.mubr.f32.gmra.mrb[0].mxu0 %v202
  %v539 = vpop.f32.mrb[0].mxu0
  %v540 = vadd.f32 0.0, %v539
  %v541 = vpop.f32.mrb[0].mxu0
  %542 = vmatprep.mubr.f32.mxu0 0.0
  %543 = vmatmul.mubr.f32.gmra.mrb[0].mxu0 %v205
  %v544 = vpop.f32.mrb[0].mxu0
  %v545 = vadd.f32 0.0, %v544
  %v546 = vpop.f32.mrb[0].mxu0
  %547 = vmatprep.mubr.f32.mxu0 0.0
  %548 = vmatmul.mubr.f32.gmra.mrb[0].mxu0 %v208
  %v549 = vpop.f32.mrb[0].mxu0
  %v550 = vadd.f32 0.0, %v549
  %v551 = vpop.f32.mrb[0].mxu0
  %552 = vmatprep.mubr.f32.mxu0 0.0
  %553 = vmatmul.mubr.f32.gmra.mrb[0].mxu0 %v211
  %v554 = vpop.f32.mrb[0].mxu0
  %v555 = vadd.f32 0.0, %v554
  %v556 = vpop.f32.mrb[0].mxu0
  %557 = vmatprep.mubr.f32.mxu0 0.0
  %558 = vmatmul.mubr.f32.gmra.mrb[0].mxu0 %v214
  %v559 = vpop.f32.mrb[0].mxu0
  %v560 = vadd.f32 0.0, %v559
  %v561 = vpop.f32.mrb[0].mxu0
  %562 = vmatprep.mubr.f32.mxu0 0.0
  %563 = vmatmul.mubr.f32.gmra.mrb[0].mxu0 %v217
  %v564 = vpop.f32.mrb[0].mxu0
  %v565 = vadd.f32 0.0, %v564
  %v566 = vpop.f32.mrb[0].mxu0
  %567 = vmatprep.mubr.f32.mxu0 0.0
  %568 = vmatmul.mubr.f32.gmra.mrb[0].mxu0 %v220
  %v569 = vpop.f32.mrb[0].mxu0
  %v570 = vadd.f32 0.0, %v569
  %v571 = vpop.f32.mrb[0].mxu0
  %572 = vmatprep.mubr.f32.mxu0 0.0
  %573 = vmatmul.mubr.f32.gmra.mrb[0].mxu0 %v223
  %v574 = vpop.f32.mrb[0].mxu0
  %v575 = vadd.f32 0.0, %v574
  %v576 = vpop.f32.mrb[0].mxu0
  %577 = vmatprep.mubr.f32.mxu0 0.0
  %578 = vmatmul.mubr.f32.gmra.mrb[0].mxu0 %v226
  %v579 = vpop.f32.mrb[0].mxu0
  %v580 = vadd.f32 0.0, %v579
  %v581 = vpop.f32.mrb[0].mxu0
  %582 = vmatprep.mubr.f32.mxu0 0.0
  %583 = vmatmul.mubr.f32.gmra.mrb[0].mxu0 %v229
  %v584 = vpop.f32.mrb[0].mxu0
  %v585 = vadd.f32 0.0, %v584
  %v586 = vpop.f32.mrb[0].mxu0
  %587 = vmatprep.mubr.f32.mxu0 0.0
  %588 = vmatmul.mubr.f32.gmra.mrb[0].mxu0 %v232
  %v589 = vpop.f32.mrb[0].mxu0
  %v590 = vadd.f32 0.0, %v589
  %v591 = vpop.f32.mrb[0].mxu0
  %592 = vmatprep.mubr.f32.mxu0 0.0
  %593 = vmatmul.mubr.f32.gmra.mrb[0].mxu0 %v235
  %v594 = vpop.f32.mrb[0].mxu0
  %v595 = vadd.f32 0.0, %v594
  %v596 = vpop.f32.mrb[0].mxu0
  %597 = vmatprep.mubr.f32.mxu0 0.0
  %598 = vmatmul.mubr.f32.gmra.mrb[0].mxu0 %v238
  %v599 = vpop.f32.mrb[0].mxu0
  %v600 = vadd.f32 0.0, %v599
  %v601 = vpop.f32.mrb[0].mxu0
  %602 = vmatprep.mubr.f32.mxu0 0.0
  %603 = vmatmul.mubr.f32.gmra.mrb[0].mxu0 %v241
  %v604 = vpop.f32.mrb[0].mxu0
  %v605 = vadd.f32 0.0, %v604
  %v606 = vpop.f32.mrb[0].mxu0
  %607 = vmatprep.mubr.f32.mxu0 0.0
  %608 = vmatmul.mubr.f32.gmra.mrb[0].mxu0 %v244
  %v609 = vpop.f32.mrb[0].mxu0
  %v610 = vadd.f32 0.0, %v609
  %v611 = vpop.f32.mrb[0].mxu0
  %612 = vmatprep.mubr.f32.mxu0 0.0
  %613 = vmatmul.mubr.f32.gmra.mrb[0].mxu0 %v247
  %v614 = vpop.f32.mrb[0].mxu0
  %v615 = vadd.f32 0.0, %v614
  %v616 = vpop.f32.mrb[0].mxu0
  %617 = vmatprep.mubr.f32.mxu0 0.0
  %618 = vmatmul.mubr.f32.gmra.mrb[0].mxu0 %v250
  %v619 = vpop.f32.mrb[0].mxu0
  %v620 = vadd.f32 0.0, %v619
  %v621 = vpop.f32.mrb[0].mxu0
  %622 = vmatprep.mubr.f32.mxu0 0.0
  %623 = vmatmul.mubr.f32.gmra.mrb[0].mxu0 %v253
  %v624 = vpop.f32.mrb[0].mxu0
  %v625 = vadd.f32 0.0, %v624
  %v626 = vpop.f32.mrb[0].mxu0
  %627 = vmatprep.mubr.f32.mxu0 0.0
  %628 = vmatmul.mubr.f32.gmra.mrb[0].mxu0 %v256
  %v629 = vpop.f32.mrb[0].mxu0
  %v630 = vadd.f32 0.0, %v629
  %v631 = vpop.f32.mrb[0].mxu0
  %632 = vmatprep.mubr.f32.mxu0 0.0
  %633 = vmatmul.mubr.f32.gmra.mrb[0].mxu0 %v259
  %v634 = vpop.f32.mrb[0].mxu0
  %v635 = vadd.f32 0.0, %v634
  %v636 = vpop.f32.mrb[0].mxu0
  %637 = vmatprep.mubr.f32.mxu0 0.0
  %638 = vmatmul.mubr.f32.gmra.mrb[0].mxu0 %v262
  %v639 = vpop.f32.mrb[0].mxu0
  %v640 = vadd.f32 0.0, %v639
  %v641 = vpop.f32.mrb[0].mxu0
  %642 = vmatprep.mubr.f32.mxu0 0.0
  %643 = vmatmul.mubr.f32.gmra.mrb[0].mxu0 %v265
  %v644 = vpop.f32.mrb[0].mxu0
  %v645 = vadd.f32 0.0, %v644
  %v646 = vpop.f32.mrb[0].mxu0
  %647 = vmatprep.mubr.f32.mxu0 0.0
  %648 = vmatmul.mubr.f32.gmra.mrb[0].mxu0 %v268
  %v649 = vpop.f32.mrb[0].mxu0
  %v650 = vadd.f32 0.0, %v649
  %v651 = vpop.f32.mrb[0].mxu0
  %652 = vmatprep.mubr.f32.mxu0 0.0
  %653 = vmatmul.mubr.f32.gmra.mrb[0].mxu0 %v271
  %v654 = vpop.f32.mrb[0].mxu0
  %v655 = vadd.f32 0.0, %v654
  %v656 = vpop.f32.mrb[0].mxu0
  %657 = vmatprep.mubr.f32.mxu0 0.0
  %658 = vmatmul.mubr.f32.gmra.mrb[0].mxu0 %v274
  %v659 = vpop.f32.mrb[0].mxu0
  %v660 = vadd.f32 0.0, %v659
  %v661 = vpop.f32.mrb[0].mxu0
  %662 = vmatprep.mubr.f32.mxu0 0.0
  %663 = vmatmul.mubr.f32.gmra.mrb[0].mxu0 %v277
  %v664 = vpop.f32.mrb[0].mxu0
  %v665 = vadd.f32 0.0, %v664
  %v666 = vpop.f32.mrb[0].mxu0
  %667 = vdwg.mxu0
  %v668 = vld [vmem:[%s2] sm:$0x1]
  %v670 = vlaneseq
  %v671 = vshrl.u32 %v670, 7
  %v672 = vsub.s32 0, %v671
  %v673 = vrot.slane %v668, %v672
  %v675 = vmul.f32 %v350, %v673
  %v676 = vmul.f32 %v355, %v673
  %v677 = vmul.f32 %v360, %v673
  %v678 = vmul.f32 %v365, %v673
  %v679 = vmul.f32 %v370, %v673
  %v680 = vmul.f32 %v375, %v673
  %v681 = vmul.f32 %v380, %v673
  %v682 = vmul.f32 %v385, %v673
  %v683 = vmul.f32 %v390, %v673
  %v684 = vmul.f32 %v395, %v673
  %v685 = vmul.f32 %v400, %v673
  %v686 = vmul.f32 %v405, %v673
  %v687 = vmul.f32 %v410, %v673
  %v688 = vmul.f32 %v415, %v673
  %v689 = vmul.f32 %v420, %v673
  %v690 = vmul.f32 %v425, %v673
  %v691 = vmul.f32 %v430, %v673
  %v692 = vmul.f32 %v435, %v673
  %v693 = vmul.f32 %v440, %v673
  %v694 = vmul.f32 %v445, %v673
  %v695 = vmul.f32 %v450, %v673
  %v696 = vmul.f32 %v455, %v673
  %v697 = vmul.f32 %v460, %v673
  %v698 = vmul.f32 %v465, %v673
  %v699 = vmul.f32 %v470, %v673
  %v700 = vmul.f32 %v475, %v673
  %v701 = vmul.f32 %v480, %v673
  %v702 = vmul.f32 %v485, %v673
  %v703 = vmul.f32 %v490, %v673
  %v704 = vmul.f32 %v495, %v673
  %v705 = vmul.f32 %v500, %v673
  %v706 = vmul.f32 %v505, %v673
  %v707 = vmul.f32 %v510, %v673
  %v708 = vmul.f32 %v515, %v673
  %v709 = vmul.f32 %v520, %v673
  %v710 = vmul.f32 %v525, %v673
  %v711 = vmul.f32 %v530, %v673
  %v712 = vmul.f32 %v535, %v673
  %v713 = vmul.f32 %v540, %v673
  %v714 = vmul.f32 %v545, %v673
  %v715 = vmul.f32 %v550, %v673
  %v716 = vmul.f32 %v555, %v673
  %v717 = vmul.f32 %v560, %v673
  %v718 = vmul.f32 %v565, %v673
  %v719 = vmul.f32 %v570, %v673
  %v720 = vmul.f32 %v575, %v673
  %v721 = vmul.f32 %v580, %v673
  %v722 = vmul.f32 %v585, %v673
  %v723 = vmul.f32 %v590, %v673
  %v724 = vmul.f32 %v595, %v673
  %v725 = vmul.f32 %v600, %v673
  %v726 = vmul.f32 %v605, %v673
  %v727 = vmul.f32 %v610, %v673
  %v728 = vmul.f32 %v615, %v673
  %v729 = vmul.f32 %v620, %v673
  %v730 = vmul.f32 %v625, %v673
  %v731 = vmul.f32 %v630, %v673
  %v732 = vmul.f32 %v635, %v673
  %v733 = vmul.f32 %v640, %v673
  %v734 = vmul.f32 %v645, %v673
  %v735 = vmul.f32 %v650, %v673
  %v736 = vmul.f32 %v655, %v673
  %v737 = vmul.f32 %v660, %v673
  %v738 = vmul.f32 %v665, %v673
  %v739 = vld [vmem:[%s3] sm:$0x1]
  %v741 = vlaneseq
  %v742 = vshrl.u32 %v741, 7
  %v743 = vsub.s32 0, %v742
  %v744 = vrot.slane %v739, %v743
  %v746 = vadd.f32 %v675, %v744
  %v747 = vadd.f32 %v676, %v744
  %v748 = vadd.f32 %v677, %v744
  %v749 = vadd.f32 %v678, %v744
  %v750 = vadd.f32 %v679, %v744
  %v751 = vadd.f32 %v680, %v744
  %v752 = vadd.f32 %v681, %v744
  %v753 = vadd.f32 %v682, %v744
  %v754 = vadd.f32 %v683, %v744
  %v755 = vadd.f32 %v684, %v744
  %v756 = vadd.f32 %v685, %v744
  %v757 = vadd.f32 %v686, %v744
  %v758 = vadd.f32 %v687, %v744
  %v759 = vadd.f32 %v688, %v744
  %v760 = vadd.f32 %v689, %v744
  %v761 = vadd.f32 %v690, %v744
  %v762 = vadd.f32 %v691, %v744
  %v763 = vadd.f32 %v692, %v744
  %v764 = vadd.f32 %v693, %v744
  %v765 = vadd.f32 %v694, %v744
  %v766 = vadd.f32 %v695, %v744
  %v767 = vadd.f32 %v696, %v744
  %v768 = vadd.f32 %v697, %v744
  %v769 = vadd.f32 %v698, %v744
  %v770 = vadd.f32 %v699, %v744
  %v771 = vadd.f32 %v700, %v744
  %v772 = vadd.f32 %v701, %v744
  %v773 = vadd.f32 %v702, %v744
  %v774 = vadd.f32 %v703, %v744
  %v775 = vadd.f32 %v704, %v744
  %v776 = vadd.f32 %v705, %v744
  %v777 = vadd.f32 %v706, %v744
  %v778 = vadd.f32 %v707, %v744
  %v779 = vadd.f32 %v708, %v744
  %v780 = vadd.f32 %v709, %v744
  %v781 = vadd.f32 %v710, %v744
  %v782 = vadd.f32 %v711, %v744
  %v783 = vadd.f32 %v712, %v744
  %v784 = vadd.f32 %v713, %v744
  %v785 = vadd.f32 %v714, %v744
  %v786 = vadd.f32 %v715, %v744
  %v787 = vadd.f32 %v716, %v744
  %v788 = vadd.f32 %v717, %v744
  %v789 = vadd.f32 %v718, %v744
  %v790 = vadd.f32 %v719, %v744
  %v791 = vadd.f32 %v720, %v744
  %v792 = vadd.f32 %v721, %v744
  %v793 = vadd.f32 %v722, %v744
  %v794 = vadd.f32 %v723, %v744
  %v795 = vadd.f32 %v724, %v744
  %v796 = vadd.f32 %v725, %v744
  %v797 = vadd.f32 %v726, %v744
  %v798 = vadd.f32 %v727, %v744
  %v799 = vadd.f32 %v728, %v744
  %v800 = vadd.f32 %v729, %v744
  %v801 = vadd.f32 %v730, %v744
  %v802 = vadd.f32 %v731, %v744
  %v803 = vadd.f32 %v732, %v744
  %v804 = vadd.f32 %v733, %v744
  %v805 = vadd.f32 %v734, %v744
  %v806 = vadd.f32 %v735, %v744
  %v807 = vadd.f32 %v736, %v744
  %v808 = vadd.f32 %v737, %v744
  %v809 = vadd.f32 %v738, %v744
  %vm810 = vcmask 64512
  %811 = vst.msk [vmem:[%s4] sm:$0xff] %vm810, %v746
  %812 = vst.msk [vmem:[%s4 + $0x8] sm:$0xff] %vm810, %v747
  %813 = vst.msk [vmem:[%s4 + $0x10] sm:$0xff] %vm810, %v748
  %814 = vst.msk [vmem:[%s4 + $0x18] sm:$0xff] %vm810, %v749
  %815 = vst.msk [vmem:[%s4 + $0x20] sm:$0xff] %vm810, %v750
  %816 = vst.msk [vmem:[%s4 + $0x28] sm:$0xff] %vm810, %v751
  %817 = vst.msk [vmem:[%s4 + $0x30] sm:$0xff] %vm810, %v752
  %818 = vst.msk [vmem:[%s4 + $0x38] sm:$0xff] %vm810, %v753
  %819 = vst.msk [vmem:[%s4 + $0x40] sm:$0xff] %vm810, %v754
  %820 = vst.msk [vmem:[%s4 + $0x48] sm:$0xff] %vm810, %v755
  %821 = vst.msk [vmem:[%s4 + $0x50] sm:$0xff] %vm810, %v756
  %822 = vst.msk [vmem:[%s4 + $0x58] sm:$0xff] %vm810, %v757
  %823 = vst.msk [vmem:[%s4 + $0x60] sm:$0xff] %vm810, %v758
  %824 = vst.msk [vmem:[%s4 + $0x68] sm:$0xff] %vm810, %v759
  %825 = vst.msk [vmem:[%s4 + $0x70] sm:$0xff] %vm810, %v760
  %826 = vst.msk [vmem:[%s4 + $0x78] sm:$0xff] %vm810, %v761
  %827 = vst.msk [vmem:[%s4 + $0x80] sm:$0xff] %vm810, %v762
  %828 = vst.msk [vmem:[%s4 + $0x88] sm:$0xff] %vm810, %v763
  %829 = vst.msk [vmem:[%s4 + $0x90] sm:$0xff] %vm810, %v764
  %830 = vst.msk [vmem:[%s4 + $0x98] sm:$0xff] %vm810, %v765
  %831 = vst.msk [vmem:[%s4 + $0xa0] sm:$0xff] %vm810, %v766
  %832 = vst.msk [vmem:[%s4 + $0xa8] sm:$0xff] %vm810, %v767
  %833 = vst.msk [vmem:[%s4 + $0xb0] sm:$0xff] %vm810, %v768
  %834 = vst.msk [vmem:[%s4 + $0xb8] sm:$0xff] %vm810, %v769
  %835 = vst.msk [vmem:[%s4 + $0xc0] sm:$0xff] %vm810, %v770
  %836 = vst.msk [vmem:[%s4 + $0xc8] sm:$0xff] %vm810, %v771
  %837 = vst.msk [vmem:[%s4 + $0xd0] sm:$0xff] %vm810, %v772
  %838 = vst.msk [vmem:[%s4 + $0xd8] sm:$0xff] %vm810, %v773
  %839 = vst.msk [vmem:[%s4 + $0xe0] sm:$0xff] %vm810, %v774
  %840 = vst.msk [vmem:[%s4 + $0xe8] sm:$0xff] %vm810, %v775
  %841 = vst.msk [vmem:[%s4 + $0xf0] sm:$0xff] %vm810, %v776
  %842 = vst.msk [vmem:[%s4 + $0xf8] sm:$0xff] %vm810, %v777
  %843 = vst.msk [vmem:[%s4 + $0x100] sm:$0xff] %vm810, %v778
  %844 = vst.msk [vmem:[%s4 + $0x108] sm:$0xff] %vm810, %v779
  %845 = vst.msk [vmem:[%s4 + $0x110] sm:$0xff] %vm810, %v780
  %846 = vst.msk [vmem:[%s4 + $0x118] sm:$0xff] %vm810, %v781
  %847 = vst.msk [vmem:[%s4 + $0x120] sm:$0xff] %vm810, %v782
  %848 = vst.msk [vmem:[%s4 + $0x128] sm:$0xff] %vm810, %v783
  %849 = vst.msk [vmem:[%s4 + $0x130] sm:$0xff] %vm810, %v784
  %850 = vst.msk [vmem:[%s4 + $0x138] sm:$0xff] %vm810, %v785
  %851 = vst.msk [vmem:[%s4 + $0x140] sm:$0xff] %vm810, %v786
  %852 = vst.msk [vmem:[%s4 + $0x148] sm:$0xff] %vm810, %v787
  %853 = vst.msk [vmem:[%s4 + $0x150] sm:$0xff] %vm810, %v788
  %854 = vst.msk [vmem:[%s4 + $0x158] sm:$0xff] %vm810, %v789
  %855 = vst.msk [vmem:[%s4 + $0x160] sm:$0xff] %vm810, %v790
  %856 = vst.msk [vmem:[%s4 + $0x168] sm:$0xff] %vm810, %v791
  %857 = vst.msk [vmem:[%s4 + $0x170] sm:$0xff] %vm810, %v792
  %858 = vst.msk [vmem:[%s4 + $0x178] sm:$0xff] %vm810, %v793
  %859 = vst.msk [vmem:[%s4 + $0x180] sm:$0xff] %vm810, %v794
  %860 = vst.msk [vmem:[%s4 + $0x188] sm:$0xff] %vm810, %v795
  %861 = vst.msk [vmem:[%s4 + $0x190] sm:$0xff] %vm810, %v796
  %862 = vst.msk [vmem:[%s4 + $0x198] sm:$0xff] %vm810, %v797
  %863 = vst.msk [vmem:[%s4 + $0x1a0] sm:$0xff] %vm810, %v798
  %864 = vst.msk [vmem:[%s4 + $0x1a8] sm:$0xff] %vm810, %v799
  %865 = vst.msk [vmem:[%s4 + $0x1b0] sm:$0xff] %vm810, %v800
  %866 = vst.msk [vmem:[%s4 + $0x1b8] sm:$0xff] %vm810, %v801
  %867 = vst.msk [vmem:[%s4 + $0x1c0] sm:$0xff] %vm810, %v802
  %868 = vst.msk [vmem:[%s4 + $0x1c8] sm:$0xff] %vm810, %v803
  %869 = vst.msk [vmem:[%s4 + $0x1d0] sm:$0xff] %vm810, %v804
  %870 = vst.msk [vmem:[%s4 + $0x1d8] sm:$0xff] %vm810, %v805
  %871 = vst.msk [vmem:[%s4 + $0x1e0] sm:$0xff] %vm810, %v806
  %872 = vst.msk [vmem:[%s4 + $0x1e8] sm:$0xff] %vm810, %v807
  %873 = vst.msk [vmem:[%s4 + $0x1f0] sm:$0xff] %vm810, %v808
  %874 = vst.msk [vmem:[%s4 + $0x1f8] sm:$0xff] %vm810, %v809
  // Predicated region
  $region18: #{_lambda_.3} parent=0 // pred_check
    _
  $region19: #{_lambda_.3} parent=0 // pred_check_branch
    %876 = sbr.rel (0) target = $region21
  $region20: #{_lambda_.3} parent=0 // pred_region
    _
  $region21: #{_lambda_.3} parent=0 // pred_fallthru
    _
  // Predicated region
  $region22: #{_lambda_.3} parent=0 // pred_check
    _
  $region23: #{_lambda_.3} parent=0 // pred_check_branch
    %878 = sbr.rel (0) target = $region25
  $region24: #{_lambda_.3} parent=0 // pred_region
    _
  $region25: #{_lambda_.3} parent=0 // pred_fallthru
    _

</llo_original>
